<compile_context>
chip_gen: v5e
topology: v5e:2x2
jax: 0.10.0
libtpu: 0.0.40
codegen_flags: <defaults>
</compile_context>

<pallas_src>
import math

import jax
import jax.numpy as jnp
from jax import lax
from jax.experimental import pallas as pl
from jax.experimental.pallas import tpu as pltpu

# (in_dim, out_dim) for each Linear+LayerNorm+GELU block (encoder + decoder)
LAYER_DIMS = [(32, 128), (128, 256), (256, 512),
              (512, 256), (256, 128), (128, 64)]
FINAL_DIM = (64, 64)
OUT_PAD = 128           # lane-dense padded width of the final Linear / output
NUM_CLASSES = 10        # nn.Embedding(10, 32)
EMB_DIM = 32
LN_EPS = 1e-5

# Sweepable.  2048 keeps the ~0.35us/grid-step overhead at a few percent while
# the largest f32 intermediate (2048x512x4B = 4 MiB) plus weights/output stay
# well inside scoped VMEM on every generation (see vmem_limit_bytes below).
TOKEN_TILE_MAX = 2048


def _round_up(x, m):
    return (x + m - 1) // m * m


def _cdiv(a, b):
    return -(-a // b)


def _select_pointwise_dtype():
    """bf16 pointwise on chips with a bf16 VPU/EUP (v6e/v7x); f32 elsewhere (v5e & older)."""
    try:
        kind = jax.devices()[0].device_kind.lower()
    except Exception:
        return jnp.float32
    if ("v6" in kind) or ("v7" in kind) or ("7x" in kind):
        return jnp.bfloat16
    return jnp.float32


# ---------------------------------------------------------------------------
# math helpers
# ---------------------------------------------------------------------------
_SQRT_2_OVER_PI = 0.7978845608028654
_GELU_C = 0.044715


def _gelu_tanh(x):
    """tanh-form GELU: 0.5*x*(1+tanh(sqrt(2/pi)*(x+0.044715*x^3))).

    Constants are Python floats (weak-typed) so bf16 inputs stay bf16; the
    tanh goes to the EUP slot and is essentially free next to the VALU work.
    """
    inner = _SQRT_2_OVER_PI * (x + _GELU_C * (x * x * x))
    return 0.5 * x * (1.0 + jnp.tanh(inner))


def _ln_gelu(y, vec, pw_dtype):
    """bias-add + LayerNorm + GELU for one layer.

    y   : (tile, dout) f32 matmul output (no bias yet)
    vec : (3, dout) f32 = [bias; gamma; beta]
    Stats (sum, sum of squares, rsqrt) stay f32; normalize/affine/GELU run in
    pw_dtype (bf16 on v6e/v7x, f32 on v5e) and the result feeds the next
    matmul directly.
    """
    dout = y.shape[-1]
    b, g, be = vec[0:1, :], vec[1:2, :], vec[2:3, :]
    y = y + b                                                    # f32
    inv_d = 1.0 / dout
    mu = jnp.sum(y, axis=-1, keepdims=True) * inv_d              # one-pass LN
    ex2 = jnp.sum(y * y, axis=-1, keepdims=True) * inv_d
    inv = lax.rsqrt(ex2 - mu * mu + LN_EPS)                      # f32
    yc = y.astype(pw_dtype)
    xn = (yc - mu.astype(pw_dtype)) * inv.astype(pw_dtype)
    xn = xn * g.astype(pw_dtype) + be.astype(pw_dtype)
    return _gelu_tanh(xn)


def _gelu_ref(x):
    # exact-erf GELU (nn.GELU(approximate='none')) for the pure-f32 reference
    return 0.5 * x * (1.0 + lax.erf(x * (1.0 / math.sqrt(2.0))))


def _layernorm_ref(x, gamma, beta):
    mu = jnp.mean(x, axis=-1, keepdims=True)
    var = jnp.mean((x - mu) ** 2, axis=-1, keepdims=True)
    return (x - mu) * lax.rsqrt(var + LN_EPS) * gamma + beta


# ---------------------------------------------------------------------------
# Pallas kernel
# ---------------------------------------------------------------------------
def _make_kernel(pw_dtype):
    """Kernel operands (after tokens):
       [emb@W1 (10,128) bf16, vec1 (3,128) f32,
        W2 bf16, vec2, ..., W6 bf16, vec6,
        Wf (64,128) bf16, bf (1,128) f32]   + out_ref."""

    def kernel(tok_ref, *refs):
        out_ref = refs[-1]
        prefs = refs[:-1]
        tile = tok_ref.shape[0]

        # Fused embedding + layer-1 matmul: onehot(tile,10) @ (emb@W1)(10,128).
        tok = tok_ref[...]                                       # (tile, 1) i32
        classes = lax.broadcasted_iota(jnp.int32, (tile, NUM_CLASSES), 1)
        onehot = (classes == tok).astype(jnp.bfloat16)
        y = jnp.dot(onehot, prefs[0][...],
                    preferred_element_type=jnp.float32)
        h = _ln_gelu(y, prefs[1][...], pw_dtype)

        idx = 2
        for _ in LAYER_DIMS[1:]:                                 # layers 2..6
            w, vec = prefs[idx], prefs[idx + 1]
            idx += 2
            y = jnp.dot(h.astype(jnp.bfloat16), w[...],
                        preferred_element_type=jnp.float32)
            h = _ln_gelu(y, vec[...], pw_dtype)

        wf, bf = prefs[idx], prefs[idx + 1]                      # padded to 128
        z = jnp.dot(h.astype(jnp.bfloat16), wf[...],
                    preferred_element_type=jnp.float32) + bf[...]
        out_ref[...] = (jnp.tanh(z) + 1.0) * 0.5                 # lane-dense store

    return kernel


# ---------------------------------------------------------------------------
# parameters
# ---------------------------------------------------------------------------
def init_params(key):
    """Deterministic synthetic f32 parameters (shapes match the PyTorch module)."""
    params = []
    for (din, dout) in LAYER_DIMS:
        key, kw, kb, kg, kbe = jax.random.split(key, 5)
        w = jax.random.normal(kw, (din, dout), jnp.float32) / math.sqrt(din)
        b = 0.01 * jax.random.normal(kb, (1, dout), jnp.float32)
        g = 1.0 + 0.01 * jax.random.normal(kg, (1, dout), jnp.float32)
        be = 0.01 * jax.random.normal(kbe, (1, dout), jnp.float32)
        params += [w, b, g, be]
    din, dout = FINAL_DIM
    key, kw, kb, ke = jax.random.split(key, 4)
    wf = jax.random.normal(kw, (din, dout), jnp.float32) / math.sqrt(din)
    bf = 0.01 * jax.random.normal(kb, (1, dout), jnp.float32)
    params += [wf, bf]
    emb = jax.random.normal(ke, (NUM_CLASSES, EMB_DIM), jnp.float32)
    return emb, params


def prepare_kernel_params(emb, params):
    """Kernel operand list: fused (emb@W1) bf16 table, bf16 weights, packed
    (3,dout) f32 [bias;gamma;beta] per layer, and a 128-lane-padded final."""
    kp = []
    w1, b1, g1, be1 = params[0:4]
    kp.append((emb @ w1).astype(jnp.bfloat16))                   # (10, 128)
    kp.append(jnp.concatenate([b1, g1, be1], axis=0))            # (3, 128) f32
    idx = 4
    for _ in LAYER_DIMS[1:]:
        w, b, g, be = params[idx:idx + 4]
        idx += 4
        kp.append(w.astype(jnp.bfloat16))
        kp.append(jnp.concatenate([b, g, be], axis=0))
    wf, bf = params[idx], params[idx + 1]
    wf_p = jnp.zeros((FINAL_DIM[0], OUT_PAD), jnp.float32).at[:, :FINAL_DIM[1]].set(wf)
    bf_p = jnp.zeros((1, OUT_PAD), jnp.float32).at[:, :FINAL_DIM[1]].set(bf)
    kp.append(wf_p.astype(jnp.bfloat16))
    kp.append(bf_p)
    return kp


# ---------------------------------------------------------------------------
# wrapper
# ---------------------------------------------------------------------------
def ascii_art_forward(x_int, kernel_params):
    """Full forward, everything (incl. embedding) inside one Pallas kernel."""
    pw_dtype = _select_pointwise_dtype()

    tokens = x_int.astype(jnp.int32).reshape(-1)                 # x.long().view(-1)
    n = tokens.shape[0]

    # Balanced token tiles: >=2 grid steps (both v7x TCs busy), even step
    # count, tile a multiple of 8 and <= TOKEN_TILE_MAX, <8 pad rows per step.
    num_steps = max(2, _cdiv(n, TOKEN_TILE_MAX))
    num_steps = _round_up(num_steps, 2)
    tile = _round_up(_cdiv(n, num_steps), 8)
    n_pad = tile * num_steps
    tokens_p = jnp.pad(tokens, (0, n_pad - n)).reshape(n_pad, 1)

    const2d = lambda i: (0, 0)
    param_specs = [pl.BlockSpec(p.shape, const2d) for p in kernel_params]

    out = pl.pallas_call(
        _make_kernel(pw_dtype),
        out_shape=jax.ShapeDtypeStruct((n_pad, OUT_PAD), jnp.float32),
        grid_spec=pltpu.PrefetchScalarGridSpec(
            num_scalar_prefetch=0,
            grid=(num_steps,),
            in_specs=[pl.BlockSpec((tile, 1), lambda i: (i, 0))]  # token ids
                     + param_specs,                               # resident params
            out_specs=pl.BlockSpec((tile, OUT_PAD), lambda i: (i, 0)),
        ),
        compiler_params=pltpu.CompilerParams(
            dimension_semantics=("parallel",),
            # tile=2048: ~4 MiB largest f32 intermediate, ~1.4 MiB bf16 weights
            # (double-buffered), padded token/output blocks -> ~20-25 MiB peak.
            vmem_limit_bytes=48 * 1024 * 1024),
    )(tokens_p, *kernel_params)

    # pad rows and the zero-padded lanes 64..127 are dropped here
    return out[:n, :FINAL_DIM[1]].reshape(-1, 8, 8)              # output.view(-1,8,8)


def ascii_art_reference(x_int, emb, params):
    """Pure-JAX f32 reference (exact-erf GELU), for validation."""
    tokens = x_int.astype(jnp.int32).reshape(-1)
    h = jnp.take(emb, tokens, axis=0)
    idx = 0
    for _ in LAYER_DIMS:
        w, b, g, be = params[idx:idx + 4]
        idx += 4
        y = h @ w + b
        y = _layernorm_ref(y, g, be)
        h = _gelu_ref(y)
    wf, bf = params[idx], params[idx + 1]
    y = jnp.tanh(h @ wf + bf)
    return ((y + 1.0) * 0.5).reshape(-1, 8, 8)


if __name__ == "__main__":
    key = jax.random.PRNGKey(0)
    key, k_in = jax.random.split(key)
    emb, params = init_params(key)
    kernel_params = prepare_kernel_params(emb, params)

    # small digit-sequence input: batch=2, seq=8 -> x.view(-1) = 16 tokens
    x = jax.random.randint(k_in, (2, 8), 0, 10, jnp.int32)

    out = jax.block_until_ready(ascii_art_forward(x, kernel_params))
    ref = jax.block_until_ready(ascii_art_reference(x, emb, params))

    # PyTorch: output.view(-1, 8, 8) over 16 flattened tokens -> (16, 8, 8)
    assert out.shape == (16, 8, 8), out.shape
    assert out.dtype == jnp.float32, out.dtype
    # bf16 matmul operands + bf16 pointwise (on v6e/v7x) + tanh-form GELU vs a
    # pure-f32 exact-erf reference: loose tolerance by design (perf tradeoff
    # accepted in the review).
    err = float(jnp.max(jnp.abs(out - ref)))
    assert err < 8e-2, f"max abs err {err} vs f32 reference"
    print("KERNEL_OK")
</pallas_src>

<mosaic_0001>
module attributes {stable_mosaic.version = 11 : i64} {
  func.func @kernel(%arg0: i32, %arg1: memref<8x1xi32, #tpu.memory_space<vmem>>, %arg2: memref<10x128xbf16, #tpu.memory_space<vmem>>, %arg3: memref<3x128xf32, #tpu.memory_space<vmem>>, %arg4: memref<128x256xbf16, #tpu.memory_space<vmem>>, %arg5: memref<3x256xf32, #tpu.memory_space<vmem>>, %arg6: memref<256x512xbf16, #tpu.memory_space<vmem>>, %arg7: memref<3x512xf32, #tpu.memory_space<vmem>>, %arg8: memref<512x256xbf16, #tpu.memory_space<vmem>>, %arg9: memref<3x256xf32, #tpu.memory_space<vmem>>, %arg10: memref<256x128xbf16, #tpu.memory_space<vmem>>, %arg11: memref<3x128xf32, #tpu.memory_space<vmem>>, %arg12: memref<128x64xbf16, #tpu.memory_space<vmem>>, %arg13: memref<3x64xf32, #tpu.memory_space<vmem>>, %arg14: memref<64x128xbf16, #tpu.memory_space<vmem>>, %arg15: memref<1x128xf32, #tpu.memory_space<vmem>>, %arg16: memref<8x128xf32, #tpu.memory_space<vmem>>) attributes {dimension_semantics = [#tpu.dimension_semantics<parallel>], iteration_bounds = array<i64: 2>, scalar_prefetch = 0 : i64, scratch_operands = 0 : i64, tpu.core_type = #tpu.core_type<tc>, window_params = [{transform_indices = @transform_0, window_bounds = array<i64: 8, 1>}, {pipeline_mode = #tpu.pipeline_mode<synchronous>, transform_indices = @transform_1, window_bounds = array<i64: 10, 128>}, {pipeline_mode = #tpu.pipeline_mode<synchronous>, transform_indices = @transform_2, window_bounds = array<i64: 3, 128>}, {pipeline_mode = #tpu.pipeline_mode<synchronous>, transform_indices = @transform_3, window_bounds = array<i64: 128, 256>}, {pipeline_mode = #tpu.pipeline_mode<synchronous>, transform_indices = @transform_4, window_bounds = array<i64: 3, 256>}, {pipeline_mode = #tpu.pipeline_mode<synchronous>, transform_indices = @transform_5, window_bounds = array<i64: 256, 512>}, {pipeline_mode = #tpu.pipeline_mode<synchronous>, transform_indices = @transform_6, window_bounds = array<i64: 3, 512>}, {pipeline_mode = #tpu.pipeline_mode<synchronous>, transform_indices = @transform_7, window_bounds = array<i64: 512, 256>}, {pipeline_mode = #tpu.pipeline_mode<synchronous>, transform_indices = @transform_8, window_bounds = array<i64: 3, 256>}, {pipeline_mode = #tpu.pipeline_mode<synchronous>, transform_indices = @transform_9, window_bounds = array<i64: 256, 128>}, {pipeline_mode = #tpu.pipeline_mode<synchronous>, transform_indices = @transform_10, window_bounds = array<i64: 3, 128>}, {pipeline_mode = #tpu.pipeline_mode<synchronous>, transform_indices = @transform_11, window_bounds = array<i64: 128, 64>}, {pipeline_mode = #tpu.pipeline_mode<synchronous>, transform_indices = @transform_12, window_bounds = array<i64: 3, 64>}, {pipeline_mode = #tpu.pipeline_mode<synchronous>, transform_indices = @transform_13, window_bounds = array<i64: 64, 128>}, {pipeline_mode = #tpu.pipeline_mode<synchronous>, transform_indices = @transform_14, window_bounds = array<i64: 1, 128>}, {transform_indices = @transform_15, window_bounds = array<i64: 8, 128>}]} {
    %c0 = arith.constant 0 : index
    %c0_0 = arith.constant 0 : index
    %0 = vector.load %arg1[%c0, %c0_0] : memref<8x1xi32, #tpu.memory_space<vmem>>, vector<8x1xi32>
    %1 = tpu.iota {dimensions = array<i32: 1>} : vector<8x10xi32>
    %2 = vector.broadcast %0 : vector<8x1xi32> to vector<8x10xi32>
    %3 = arith.cmpi eq, %1, %2 : vector<8x10xi32>
    %4 = arith.extui %3 : vector<8x10xi1> to vector<8x10xi32>
    %5 = arith.sitofp %4 : vector<8x10xi32> to vector<8x10xf32>
    %6 = arith.truncf %5 : vector<8x10xf32> to vector<8x10xbf16>
    %c0_1 = arith.constant 0 : index
    %c0_2 = arith.constant 0 : index
    %7 = vector.load %arg2[%c0_1, %c0_2] : memref<10x128xbf16, #tpu.memory_space<vmem>>, vector<10x128xbf16>
    %cst = arith.constant dense<0.000000e+00> : vector<8x128xf32>
    %8 = tpu.matmul %6, %7, %cst {dimension_numbers = #tpu.dot_dimension_numbers<[1], [0], [0], [1], [0, 0, 1, 1], [], []>} : vector<8x10xbf16>, vector<10x128xbf16>, vector<8x128xf32> -> vector<8x128xf32>
    %c0_3 = arith.constant 0 : index
    %c0_4 = arith.constant 0 : index
    %9 = vector.load %arg3[%c0_3, %c0_4] : memref<3x128xf32, #tpu.memory_space<vmem>>, vector<3x128xf32>
    %10 = vector.extract_strided_slice %9 {offsets = [0, 0], sizes = [1, 128], strides = [1, 1]} : vector<3x128xf32> to vector<1x128xf32>
    %11 = vector.extract_strided_slice %9 {offsets = [1, 0], sizes = [1, 128], strides = [1, 1]} : vector<3x128xf32> to vector<1x128xf32>
    %12 = vector.extract_strided_slice %9 {offsets = [2, 0], sizes = [1, 128], strides = [1, 1]} : vector<3x128xf32> to vector<1x128xf32>
    %13 = vector.broadcast %10 : vector<1x128xf32> to vector<8x128xf32>
    %14 = arith.addf %8, %13 : vector<8x128xf32>
    %cst_5 = arith.constant dense<0.000000e+00> : vector<8xf32>
    %15 = vector.multi_reduction <add>, %14, %cst_5 [1] : vector<8x128xf32> to vector<8xf32>
    %16 = vector.shape_cast %15 : vector<8xf32> to vector<8x1xf32>
    %cst_6 = arith.constant 7.812500e-03 : f32
    %17 = vector.broadcast %cst_6 : f32 to vector<8x1xf32>
    %18 = arith.mulf %16, %17 : vector<8x1xf32>
    %19 = arith.mulf %14, %14 : vector<8x128xf32>
    %cst_7 = arith.constant dense<0.000000e+00> : vector<8xf32>
    %20 = vector.multi_reduction <add>, %19, %cst_7 [1] : vector<8x128xf32> to vector<8xf32>
    %21 = vector.shape_cast %20 : vector<8xf32> to vector<8x1xf32>
    %cst_8 = arith.constant 7.812500e-03 : f32
    %22 = vector.broadcast %cst_8 : f32 to vector<8x1xf32>
    %23 = arith.mulf %21, %22 : vector<8x1xf32>
    %24 = arith.mulf %18, %18 : vector<8x1xf32>
    %25 = arith.subf %23, %24 : vector<8x1xf32>
    %cst_9 = arith.constant 9.99999974E-6 : f32
    %26 = vector.broadcast %cst_9 : f32 to vector<8x1xf32>
    %27 = arith.addf %25, %26 : vector<8x1xf32>
    %28 = math.rsqrt %27 : vector<8x1xf32>
    %29 = vector.broadcast %18 : vector<8x1xf32> to vector<8x128xf32>
    %30 = arith.subf %14, %29 : vector<8x128xf32>
    %31 = vector.broadcast %28 : vector<8x1xf32> to vector<8x128xf32>
    %32 = arith.mulf %30, %31 : vector<8x128xf32>
    %33 = vector.broadcast %11 : vector<1x128xf32> to vector<8x128xf32>
    %34 = arith.mulf %32, %33 : vector<8x128xf32>
    %35 = vector.broadcast %12 : vector<1x128xf32> to vector<8x128xf32>
    %36 = arith.addf %34, %35 : vector<8x128xf32>
    %37 = arith.mulf %36, %36 : vector<8x128xf32>
    %38 = arith.mulf %37, %36 : vector<8x128xf32>
    %cst_10 = arith.constant 4.471500e-02 : f32
    %39 = vector.broadcast %cst_10 : f32 to vector<8x128xf32>
    %40 = arith.mulf %39, %38 : vector<8x128xf32>
    %41 = arith.addf %36, %40 : vector<8x128xf32>
    %cst_11 = arith.constant 0.797884583 : f32
    %42 = vector.broadcast %cst_11 : f32 to vector<8x128xf32>
    %43 = arith.mulf %42, %41 : vector<8x128xf32>
    %cst_12 = arith.constant 5.000000e-01 : f32
    %44 = vector.broadcast %cst_12 : f32 to vector<8x128xf32>
    %45 = arith.mulf %44, %36 : vector<8x128xf32>
    %46 = math.tanh %43 : vector<8x128xf32>
    %cst_13 = arith.constant 1.000000e+00 : f32
    %47 = vector.broadcast %cst_13 : f32 to vector<8x128xf32>
    %48 = arith.addf %47, %46 : vector<8x128xf32>
    %49 = arith.mulf %45, %48 : vector<8x128xf32>
    %50 = arith.truncf %49 : vector<8x128xf32> to vector<8x128xbf16>
    %c0_14 = arith.constant 0 : index
    %c0_15 = arith.constant 0 : index
    %51 = vector.load %arg4[%c0_14, %c0_15] : memref<128x256xbf16, #tpu.memory_space<vmem>>, vector<128x256xbf16>
    %cst_16 = arith.constant dense<0.000000e+00> : vector<8x256xf32>
    %52 = tpu.matmul %50, %51, %cst_16 {dimension_numbers = #tpu.dot_dimension_numbers<[1], [0], [0], [1], [0, 0, 1, 1], [], []>} : vector<8x128xbf16>, vector<128x256xbf16>, vector<8x256xf32> -> vector<8x256xf32>
    %c0_17 = arith.constant 0 : index
    %c0_18 = arith.constant 0 : index
    %53 = vector.load %arg5[%c0_17, %c0_18] : memref<3x256xf32, #tpu.memory_space<vmem>>, vector<3x256xf32>
    %54 = vector.extract_strided_slice %53 {offsets = [0, 0], sizes = [1, 256], strides = [1, 1]} : vector<3x256xf32> to vector<1x256xf32>
    %55 = vector.extract_strided_slice %53 {offsets = [1, 0], sizes = [1, 256], strides = [1, 1]} : vector<3x256xf32> to vector<1x256xf32>
    %56 = vector.extract_strided_slice %53 {offsets = [2, 0], sizes = [1, 256], strides = [1, 1]} : vector<3x256xf32> to vector<1x256xf32>
    %57 = vector.broadcast %54 : vector<1x256xf32> to vector<8x256xf32>
    %58 = arith.addf %52, %57 : vector<8x256xf32>
    %cst_19 = arith.constant dense<0.000000e+00> : vector<8xf32>
    %59 = vector.multi_reduction <add>, %58, %cst_19 [1] : vector<8x256xf32> to vector<8xf32>
    %60 = vector.shape_cast %59 : vector<8xf32> to vector<8x1xf32>
    %cst_20 = arith.constant 3.906250e-03 : f32
    %61 = vector.broadcast %cst_20 : f32 to vector<8x1xf32>
    %62 = arith.mulf %60, %61 : vector<8x1xf32>
    %63 = arith.mulf %58, %58 : vector<8x256xf32>
    %cst_21 = arith.constant dense<0.000000e+00> : vector<8xf32>
    %64 = vector.multi_reduction <add>, %63, %cst_21 [1] : vector<8x256xf32> to vector<8xf32>
    %65 = vector.shape_cast %64 : vector<8xf32> to vector<8x1xf32>
    %cst_22 = arith.constant 3.906250e-03 : f32
    %66 = vector.broadcast %cst_22 : f32 to vector<8x1xf32>
    %67 = arith.mulf %65, %66 : vector<8x1xf32>
    %68 = arith.mulf %62, %62 : vector<8x1xf32>
    %69 = arith.subf %67, %68 : vector<8x1xf32>
    %cst_23 = arith.constant 9.99999974E-6 : f32
    %70 = vector.broadcast %cst_23 : f32 to vector<8x1xf32>
    %71 = arith.addf %69, %70 : vector<8x1xf32>
    %72 = math.rsqrt %71 : vector<8x1xf32>
    %73 = vector.broadcast %62 : vector<8x1xf32> to vector<8x256xf32>
    %74 = arith.subf %58, %73 : vector<8x256xf32>
    %75 = vector.broadcast %72 : vector<8x1xf32> to vector<8x256xf32>
    %76 = arith.mulf %74, %75 : vector<8x256xf32>
    %77 = vector.broadcast %55 : vector<1x256xf32> to vector<8x256xf32>
    %78 = arith.mulf %76, %77 : vector<8x256xf32>
    %79 = vector.broadcast %56 : vector<1x256xf32> to vector<8x256xf32>
    %80 = arith.addf %78, %79 : vector<8x256xf32>
    %81 = arith.mulf %80, %80 : vector<8x256xf32>
    %82 = arith.mulf %81, %80 : vector<8x256xf32>
    %cst_24 = arith.constant 4.471500e-02 : f32
    %83 = vector.broadcast %cst_24 : f32 to vector<8x256xf32>
    %84 = arith.mulf %83, %82 : vector<8x256xf32>
    %85 = arith.addf %80, %84 : vector<8x256xf32>
    %cst_25 = arith.constant 0.797884583 : f32
    %86 = vector.broadcast %cst_25 : f32 to vector<8x256xf32>
    %87 = arith.mulf %86, %85 : vector<8x256xf32>
    %cst_26 = arith.constant 5.000000e-01 : f32
    %88 = vector.broadcast %cst_26 : f32 to vector<8x256xf32>
    %89 = arith.mulf %88, %80 : vector<8x256xf32>
    %90 = math.tanh %87 : vector<8x256xf32>
    %cst_27 = arith.constant 1.000000e+00 : f32
    %91 = vector.broadcast %cst_27 : f32 to vector<8x256xf32>
    %92 = arith.addf %91, %90 : vector<8x256xf32>
    %93 = arith.mulf %89, %92 : vector<8x256xf32>
    %94 = arith.truncf %93 : vector<8x256xf32> to vector<8x256xbf16>
    %c0_28 = arith.constant 0 : index
    %c0_29 = arith.constant 0 : index
    %95 = vector.load %arg6[%c0_28, %c0_29] : memref<256x512xbf16, #tpu.memory_space<vmem>>, vector<256x512xbf16>
    %cst_30 = arith.constant dense<0.000000e+00> : vector<8x512xf32>
    %96 = tpu.matmul %94, %95, %cst_30 {dimension_numbers = #tpu.dot_dimension_numbers<[1], [0], [0], [1], [0, 0, 1, 1], [], []>} : vector<8x256xbf16>, vector<256x512xbf16>, vector<8x512xf32> -> vector<8x512xf32>
    %c0_31 = arith.constant 0 : index
    %c0_32 = arith.constant 0 : index
    %97 = vector.load %arg7[%c0_31, %c0_32] : memref<3x512xf32, #tpu.memory_space<vmem>>, vector<3x512xf32>
    %98 = vector.extract_strided_slice %97 {offsets = [0, 0], sizes = [1, 512], strides = [1, 1]} : vector<3x512xf32> to vector<1x512xf32>
    %99 = vector.extract_strided_slice %97 {offsets = [1, 0], sizes = [1, 512], strides = [1, 1]} : vector<3x512xf32> to vector<1x512xf32>
    %100 = vector.extract_strided_slice %97 {offsets = [2, 0], sizes = [1, 512], strides = [1, 1]} : vector<3x512xf32> to vector<1x512xf32>
    %101 = vector.broadcast %98 : vector<1x512xf32> to vector<8x512xf32>
    %102 = arith.addf %96, %101 : vector<8x512xf32>
    %cst_33 = arith.constant dense<0.000000e+00> : vector<8xf32>
    %103 = vector.multi_reduction <add>, %102, %cst_33 [1] : vector<8x512xf32> to vector<8xf32>
    %104 = vector.shape_cast %103 : vector<8xf32> to vector<8x1xf32>
    %cst_34 = arith.constant 0.001953125 : f32
    %105 = vector.broadcast %cst_34 : f32 to vector<8x1xf32>
    %106 = arith.mulf %104, %105 : vector<8x1xf32>
    %107 = arith.mulf %102, %102 : vector<8x512xf32>
    %cst_35 = arith.constant dense<0.000000e+00> : vector<8xf32>
    %108 = vector.multi_reduction <add>, %107, %cst_35 [1] : vector<8x512xf32> to vector<8xf32>
    %109 = vector.shape_cast %108 : vector<8xf32> to vector<8x1xf32>
    %cst_36 = arith.constant 0.001953125 : f32
    %110 = vector.broadcast %cst_36 : f32 to vector<8x1xf32>
    %111 = arith.mulf %109, %110 : vector<8x1xf32>
    %112 = arith.mulf %106, %106 : vector<8x1xf32>
    %113 = arith.subf %111, %112 : vector<8x1xf32>
    %cst_37 = arith.constant 9.99999974E-6 : f32
    %114 = vector.broadcast %cst_37 : f32 to vector<8x1xf32>
    %115 = arith.addf %113, %114 : vector<8x1xf32>
    %116 = math.rsqrt %115 : vector<8x1xf32>
    %117 = vector.broadcast %106 : vector<8x1xf32> to vector<8x512xf32>
    %118 = arith.subf %102, %117 : vector<8x512xf32>
    %119 = vector.broadcast %116 : vector<8x1xf32> to vector<8x512xf32>
    %120 = arith.mulf %118, %119 : vector<8x512xf32>
    %121 = vector.broadcast %99 : vector<1x512xf32> to vector<8x512xf32>
    %122 = arith.mulf %120, %121 : vector<8x512xf32>
    %123 = vector.broadcast %100 : vector<1x512xf32> to vector<8x512xf32>
    %124 = arith.addf %122, %123 : vector<8x512xf32>
    %125 = arith.mulf %124, %124 : vector<8x512xf32>
    %126 = arith.mulf %125, %124 : vector<8x512xf32>
    %cst_38 = arith.constant 4.471500e-02 : f32
    %127 = vector.broadcast %cst_38 : f32 to vector<8x512xf32>
    %128 = arith.mulf %127, %126 : vector<8x512xf32>
    %129 = arith.addf %124, %128 : vector<8x512xf32>
    %cst_39 = arith.constant 0.797884583 : f32
    %130 = vector.broadcast %cst_39 : f32 to vector<8x512xf32>
    %131 = arith.mulf %130, %129 : vector<8x512xf32>
    %cst_40 = arith.constant 5.000000e-01 : f32
    %132 = vector.broadcast %cst_40 : f32 to vector<8x512xf32>
    %133 = arith.mulf %132, %124 : vector<8x512xf32>
    %134 = math.tanh %131 : vector<8x512xf32>
    %cst_41 = arith.constant 1.000000e+00 : f32
    %135 = vector.broadcast %cst_41 : f32 to vector<8x512xf32>
    %136 = arith.addf %135, %134 : vector<8x512xf32>
    %137 = arith.mulf %133, %136 : vector<8x512xf32>
    %138 = arith.truncf %137 : vector<8x512xf32> to vector<8x512xbf16>
    %c0_42 = arith.constant 0 : index
    %c0_43 = arith.constant 0 : index
    %139 = vector.load %arg8[%c0_42, %c0_43] : memref<512x256xbf16, #tpu.memory_space<vmem>>, vector<512x256xbf16>
    %cst_44 = arith.constant dense<0.000000e+00> : vector<8x256xf32>
    %140 = tpu.matmul %138, %139, %cst_44 {dimension_numbers = #tpu.dot_dimension_numbers<[1], [0], [0], [1], [0, 0, 1, 1], [], []>} : vector<8x512xbf16>, vector<512x256xbf16>, vector<8x256xf32> -> vector<8x256xf32>
    %c0_45 = arith.constant 0 : index
    %c0_46 = arith.constant 0 : index
    %141 = vector.load %arg9[%c0_45, %c0_46] : memref<3x256xf32, #tpu.memory_space<vmem>>, vector<3x256xf32>
    %142 = vector.extract_strided_slice %141 {offsets = [0, 0], sizes = [1, 256], strides = [1, 1]} : vector<3x256xf32> to vector<1x256xf32>
    %143 = vector.extract_strided_slice %141 {offsets = [1, 0], sizes = [1, 256], strides = [1, 1]} : vector<3x256xf32> to vector<1x256xf32>
    %144 = vector.extract_strided_slice %141 {offsets = [2, 0], sizes = [1, 256], strides = [1, 1]} : vector<3x256xf32> to vector<1x256xf32>
    %145 = vector.broadcast %142 : vector<1x256xf32> to vector<8x256xf32>
    %146 = arith.addf %140, %145 : vector<8x256xf32>
    %cst_47 = arith.constant dense<0.000000e+00> : vector<8xf32>
    %147 = vector.multi_reduction <add>, %146, %cst_47 [1] : vector<8x256xf32> to vector<8xf32>
    %148 = vector.shape_cast %147 : vector<8xf32> to vector<8x1xf32>
    %cst_48 = arith.constant 3.906250e-03 : f32
    %149 = vector.broadcast %cst_48 : f32 to vector<8x1xf32>
    %150 = arith.mulf %148, %149 : vector<8x1xf32>
    %151 = arith.mulf %146, %146 : vector<8x256xf32>
    %cst_49 = arith.constant dense<0.000000e+00> : vector<8xf32>
    %152 = vector.multi_reduction <add>, %151, %cst_49 [1] : vector<8x256xf32> to vector<8xf32>
    %153 = vector.shape_cast %152 : vector<8xf32> to vector<8x1xf32>
    %cst_50 = arith.constant 3.906250e-03 : f32
    %154 = vector.broadcast %cst_50 : f32 to vector<8x1xf32>
    %155 = arith.mulf %153, %154 : vector<8x1xf32>
    %156 = arith.mulf %150, %150 : vector<8x1xf32>
    %157 = arith.subf %155, %156 : vector<8x1xf32>
    %cst_51 = arith.constant 9.99999974E-6 : f32
    %158 = vector.broadcast %cst_51 : f32 to vector<8x1xf32>
    %159 = arith.addf %157, %158 : vector<8x1xf32>
    %160 = math.rsqrt %159 : vector<8x1xf32>
    %161 = vector.broadcast %150 : vector<8x1xf32> to vector<8x256xf32>
    %162 = arith.subf %146, %161 : vector<8x256xf32>
    %163 = vector.broadcast %160 : vector<8x1xf32> to vector<8x256xf32>
    %164 = arith.mulf %162, %163 : vector<8x256xf32>
    %165 = vector.broadcast %143 : vector<1x256xf32> to vector<8x256xf32>
    %166 = arith.mulf %164, %165 : vector<8x256xf32>
    %167 = vector.broadcast %144 : vector<1x256xf32> to vector<8x256xf32>
    %168 = arith.addf %166, %167 : vector<8x256xf32>
    %169 = arith.mulf %168, %168 : vector<8x256xf32>
    %170 = arith.mulf %169, %168 : vector<8x256xf32>
    %cst_52 = arith.constant 4.471500e-02 : f32
    %171 = vector.broadcast %cst_52 : f32 to vector<8x256xf32>
    %172 = arith.mulf %171, %170 : vector<8x256xf32>
    %173 = arith.addf %168, %172 : vector<8x256xf32>
    %cst_53 = arith.constant 0.797884583 : f32
    %174 = vector.broadcast %cst_53 : f32 to vector<8x256xf32>
    %175 = arith.mulf %174, %173 : vector<8x256xf32>
    %cst_54 = arith.constant 5.000000e-01 : f32
    %176 = vector.broadcast %cst_54 : f32 to vector<8x256xf32>
    %177 = arith.mulf %176, %168 : vector<8x256xf32>
    %178 = math.tanh %175 : vector<8x256xf32>
    %cst_55 = arith.constant 1.000000e+00 : f32
    %179 = vector.broadcast %cst_55 : f32 to vector<8x256xf32>
    %180 = arith.addf %179, %178 : vector<8x256xf32>
    %181 = arith.mulf %177, %180 : vector<8x256xf32>
    %182 = arith.truncf %181 : vector<8x256xf32> to vector<8x256xbf16>
    %c0_56 = arith.constant 0 : index
    %c0_57 = arith.constant 0 : index
    %183 = vector.load %arg10[%c0_56, %c0_57] : memref<256x128xbf16, #tpu.memory_space<vmem>>, vector<256x128xbf16>
    %cst_58 = arith.constant dense<0.000000e+00> : vector<8x128xf32>
    %184 = tpu.matmul %182, %183, %cst_58 {dimension_numbers = #tpu.dot_dimension_numbers<[1], [0], [0], [1], [0, 0, 1, 1], [], []>} : vector<8x256xbf16>, vector<256x128xbf16>, vector<8x128xf32> -> vector<8x128xf32>
    %c0_59 = arith.constant 0 : index
    %c0_60 = arith.constant 0 : index
    %185 = vector.load %arg11[%c0_59, %c0_60] : memref<3x128xf32, #tpu.memory_space<vmem>>, vector<3x128xf32>
    %186 = vector.extract_strided_slice %185 {offsets = [0, 0], sizes = [1, 128], strides = [1, 1]} : vector<3x128xf32> to vector<1x128xf32>
    %187 = vector.extract_strided_slice %185 {offsets = [1, 0], sizes = [1, 128], strides = [1, 1]} : vector<3x128xf32> to vector<1x128xf32>
    %188 = vector.extract_strided_slice %185 {offsets = [2, 0], sizes = [1, 128], strides = [1, 1]} : vector<3x128xf32> to vector<1x128xf32>
    %189 = vector.broadcast %186 : vector<1x128xf32> to vector<8x128xf32>
    %190 = arith.addf %184, %189 : vector<8x128xf32>
    %cst_61 = arith.constant dense<0.000000e+00> : vector<8xf32>
    %191 = vector.multi_reduction <add>, %190, %cst_61 [1] : vector<8x128xf32> to vector<8xf32>
    %192 = vector.shape_cast %191 : vector<8xf32> to vector<8x1xf32>
    %cst_62 = arith.constant 7.812500e-03 : f32
    %193 = vector.broadcast %cst_62 : f32 to vector<8x1xf32>
    %194 = arith.mulf %192, %193 : vector<8x1xf32>
    %195 = arith.mulf %190, %190 : vector<8x128xf32>
    %cst_63 = arith.constant dense<0.000000e+00> : vector<8xf32>
    %196 = vector.multi_reduction <add>, %195, %cst_63 [1] : vector<8x128xf32> to vector<8xf32>
    %197 = vector.shape_cast %196 : vector<8xf32> to vector<8x1xf32>
    %cst_64 = arith.constant 7.812500e-03 : f32
    %198 = vector.broadcast %cst_64 : f32 to vector<8x1xf32>
    %199 = arith.mulf %197, %198 : vector<8x1xf32>
    %200 = arith.mulf %194, %194 : vector<8x1xf32>
    %201 = arith.subf %199, %200 : vector<8x1xf32>
    %cst_65 = arith.constant 9.99999974E-6 : f32
    %202 = vector.broadcast %cst_65 : f32 to vector<8x1xf32>
    %203 = arith.addf %201, %202 : vector<8x1xf32>
    %204 = math.rsqrt %203 : vector<8x1xf32>
    %205 = vector.broadcast %194 : vector<8x1xf32> to vector<8x128xf32>
    %206 = arith.subf %190, %205 : vector<8x128xf32>
    %207 = vector.broadcast %204 : vector<8x1xf32> to vector<8x128xf32>
    %208 = arith.mulf %206, %207 : vector<8x128xf32>
    %209 = vector.broadcast %187 : vector<1x128xf32> to vector<8x128xf32>
    %210 = arith.mulf %208, %209 : vector<8x128xf32>
    %211 = vector.broadcast %188 : vector<1x128xf32> to vector<8x128xf32>
    %212 = arith.addf %210, %211 : vector<8x128xf32>
    %213 = arith.mulf %212, %212 : vector<8x128xf32>
    %214 = arith.mulf %213, %212 : vector<8x128xf32>
    %cst_66 = arith.constant 4.471500e-02 : f32
    %215 = vector.broadcast %cst_66 : f32 to vector<8x128xf32>
    %216 = arith.mulf %215, %214 : vector<8x128xf32>
    %217 = arith.addf %212, %216 : vector<8x128xf32>
    %cst_67 = arith.constant 0.797884583 : f32
    %218 = vector.broadcast %cst_67 : f32 to vector<8x128xf32>
    %219 = arith.mulf %218, %217 : vector<8x128xf32>
    %cst_68 = arith.constant 5.000000e-01 : f32
    %220 = vector.broadcast %cst_68 : f32 to vector<8x128xf32>
    %221 = arith.mulf %220, %212 : vector<8x128xf32>
    %222 = math.tanh %219 : vector<8x128xf32>
    %cst_69 = arith.constant 1.000000e+00 : f32
    %223 = vector.broadcast %cst_69 : f32 to vector<8x128xf32>
    %224 = arith.addf %223, %222 : vector<8x128xf32>
    %225 = arith.mulf %221, %224 : vector<8x128xf32>
    %226 = arith.truncf %225 : vector<8x128xf32> to vector<8x128xbf16>
    %c0_70 = arith.constant 0 : index
    %c0_71 = arith.constant 0 : index
    %227 = vector.load %arg12[%c0_70, %c0_71] : memref<128x64xbf16, #tpu.memory_space<vmem>>, vector<128x64xbf16>
    %cst_72 = arith.constant dense<0.000000e+00> : vector<8x64xf32>
    %228 = tpu.matmul %226, %227, %cst_72 {dimension_numbers = #tpu.dot_dimension_numbers<[1], [0], [0], [1], [0, 0, 1, 1], [], []>} : vector<8x128xbf16>, vector<128x64xbf16>, vector<8x64xf32> -> vector<8x64xf32>
    %c0_73 = arith.constant 0 : index
    %c0_74 = arith.constant 0 : index
    %229 = vector.load %arg13[%c0_73, %c0_74] : memref<3x64xf32, #tpu.memory_space<vmem>>, vector<3x64xf32>
    %230 = vector.extract_strided_slice %229 {offsets = [0, 0], sizes = [1, 64], strides = [1, 1]} : vector<3x64xf32> to vector<1x64xf32>
    %231 = vector.extract_strided_slice %229 {offsets = [1, 0], sizes = [1, 64], strides = [1, 1]} : vector<3x64xf32> to vector<1x64xf32>
    %232 = vector.extract_strided_slice %229 {offsets = [2, 0], sizes = [1, 64], strides = [1, 1]} : vector<3x64xf32> to vector<1x64xf32>
    %233 = vector.broadcast %230 : vector<1x64xf32> to vector<8x64xf32>
    %234 = arith.addf %228, %233 : vector<8x64xf32>
    %cst_75 = arith.constant dense<0.000000e+00> : vector<8xf32>
    %235 = vector.multi_reduction <add>, %234, %cst_75 [1] : vector<8x64xf32> to vector<8xf32>
    %236 = vector.shape_cast %235 : vector<8xf32> to vector<8x1xf32>
    %cst_76 = arith.constant 1.562500e-02 : f32
    %237 = vector.broadcast %cst_76 : f32 to vector<8x1xf32>
    %238 = arith.mulf %236, %237 : vector<8x1xf32>
    %239 = arith.mulf %234, %234 : vector<8x64xf32>
    %cst_77 = arith.constant dense<0.000000e+00> : vector<8xf32>
    %240 = vector.multi_reduction <add>, %239, %cst_77 [1] : vector<8x64xf32> to vector<8xf32>
    %241 = vector.shape_cast %240 : vector<8xf32> to vector<8x1xf32>
    %cst_78 = arith.constant 1.562500e-02 : f32
    %242 = vector.broadcast %cst_78 : f32 to vector<8x1xf32>
    %243 = arith.mulf %241, %242 : vector<8x1xf32>
    %244 = arith.mulf %238, %238 : vector<8x1xf32>
    %245 = arith.subf %243, %244 : vector<8x1xf32>
    %cst_79 = arith.constant 9.99999974E-6 : f32
    %246 = vector.broadcast %cst_79 : f32 to vector<8x1xf32>
    %247 = arith.addf %245, %246 : vector<8x1xf32>
    %248 = math.rsqrt %247 : vector<8x1xf32>
    %249 = vector.broadcast %238 : vector<8x1xf32> to vector<8x64xf32>
    %250 = arith.subf %234, %249 : vector<8x64xf32>
    %251 = vector.broadcast %248 : vector<8x1xf32> to vector<8x64xf32>
    %252 = arith.mulf %250, %251 : vector<8x64xf32>
    %253 = vector.broadcast %231 : vector<1x64xf32> to vector<8x64xf32>
    %254 = arith.mulf %252, %253 : vector<8x64xf32>
    %255 = vector.broadcast %232 : vector<1x64xf32> to vector<8x64xf32>
    %256 = arith.addf %254, %255 : vector<8x64xf32>
    %257 = arith.mulf %256, %256 : vector<8x64xf32>
    %258 = arith.mulf %257, %256 : vector<8x64xf32>
    %cst_80 = arith.constant 4.471500e-02 : f32
    %259 = vector.broadcast %cst_80 : f32 to vector<8x64xf32>
    %260 = arith.mulf %259, %258 : vector<8x64xf32>
    %261 = arith.addf %256, %260 : vector<8x64xf32>
    %cst_81 = arith.constant 0.797884583 : f32
    %262 = vector.broadcast %cst_81 : f32 to vector<8x64xf32>
    %263 = arith.mulf %262, %261 : vector<8x64xf32>
    %cst_82 = arith.constant 5.000000e-01 : f32
    %264 = vector.broadcast %cst_82 : f32 to vector<8x64xf32>
    %265 = arith.mulf %264, %256 : vector<8x64xf32>
    %266 = math.tanh %263 : vector<8x64xf32>
    %cst_83 = arith.constant 1.000000e+00 : f32
    %267 = vector.broadcast %cst_83 : f32 to vector<8x64xf32>
    %268 = arith.addf %267, %266 : vector<8x64xf32>
    %269 = arith.mulf %265, %268 : vector<8x64xf32>
    %270 = arith.truncf %269 : vector<8x64xf32> to vector<8x64xbf16>
    %c0_84 = arith.constant 0 : index
    %c0_85 = arith.constant 0 : index
    %271 = vector.load %arg14[%c0_84, %c0_85] : memref<64x128xbf16, #tpu.memory_space<vmem>>, vector<64x128xbf16>
    %cst_86 = arith.constant dense<0.000000e+00> : vector<8x128xf32>
    %272 = tpu.matmul %270, %271, %cst_86 {dimension_numbers = #tpu.dot_dimension_numbers<[1], [0], [0], [1], [0, 0, 1, 1], [], []>} : vector<8x64xbf16>, vector<64x128xbf16>, vector<8x128xf32> -> vector<8x128xf32>
    %c0_87 = arith.constant 0 : index
    %c0_88 = arith.constant 0 : index
    %273 = vector.load %arg15[%c0_87, %c0_88] : memref<1x128xf32, #tpu.memory_space<vmem>>, vector<1x128xf32>
    %274 = vector.broadcast %273 : vector<1x128xf32> to vector<8x128xf32>
    %275 = arith.addf %272, %274 : vector<8x128xf32>
    %276 = math.tanh %275 : vector<8x128xf32>
    %cst_89 = arith.constant 1.000000e+00 : f32
    %277 = vector.broadcast %cst_89 : f32 to vector<8x128xf32>
    %278 = arith.addf %276, %277 : vector<8x128xf32>
    %cst_90 = arith.constant 5.000000e-01 : f32
    %279 = vector.broadcast %cst_90 : f32 to vector<8x128xf32>
    %280 = arith.mulf %278, %279 : vector<8x128xf32>
    %c0_91 = arith.constant 0 : index
    %c0_92 = arith.constant 0 : index
    %281 = vector.load %arg16[%c0_91, %c0_92] : memref<8x128xf32, #tpu.memory_space<vmem>>, vector<8x128xf32>
    tpu.vector_store %arg16[%c0_91, %c0_92], %280 {strides = array<i32>} : memref<8x128xf32, #tpu.memory_space<vmem>>, vector<8x128xf32>,
    return
  }
  func.func @transform_0(%arg0: i32) -> (i32, i32) {
    %c0_i32 = arith.constant 0 : i32
    %c0_i32_0 = arith.constant 0 : i32
    return %arg0, %c0_i32 : i32, i32
  }
  func.func @transform_1(%arg0: i32) -> (i32, i32) {
    %c0_i32 = arith.constant 0 : i32
    %c0_i32_0 = arith.constant 0 : i32
    %c0_i32_1 = arith.constant 0 : i32
    return %c0_i32, %c0_i32_0 : i32, i32
  }
  func.func @transform_2(%arg0: i32) -> (i32, i32) {
    %c0_i32 = arith.constant 0 : i32
    %c0_i32_0 = arith.constant 0 : i32
    %c0_i32_1 = arith.constant 0 : i32
    return %c0_i32, %c0_i32_0 : i32, i32
  }
  func.func @transform_3(%arg0: i32) -> (i32, i32) {
    %c0_i32 = arith.constant 0 : i32
    %c0_i32_0 = arith.constant 0 : i32
    %c0_i32_1 = arith.constant 0 : i32
    return %c0_i32, %c0_i32_0 : i32, i32
  }
  func.func @transform_4(%arg0: i32) -> (i32, i32) {
    %c0_i32 = arith.constant 0 : i32
    %c0_i32_0 = arith.constant 0 : i32
    %c0_i32_1 = arith.constant 0 : i32
    return %c0_i32, %c0_i32_0 : i32, i32
  }
  func.func @transform_5(%arg0: i32) -> (i32, i32) {
    %c0_i32 = arith.constant 0 : i32
    %c0_i32_0 = arith.constant 0 : i32
    %c0_i32_1 = arith.constant 0 : i32
    return %c0_i32, %c0_i32_0 : i32, i32
  }
  func.func @transform_6(%arg0: i32) -> (i32, i32) {
    %c0_i32 = arith.constant 0 : i32
    %c0_i32_0 = arith.constant 0 : i32
    %c0_i32_1 = arith.constant 0 : i32
    return %c0_i32, %c0_i32_0 : i32, i32
  }
  func.func @transform_7(%arg0: i32) -> (i32, i32) {
    %c0_i32 = arith.constant 0 : i32
    %c0_i32_0 = arith.constant 0 : i32
    %c0_i32_1 = arith.constant 0 : i32
    return %c0_i32, %c0_i32_0 : i32, i32
  }
  func.func @transform_8(%arg0: i32) -> (i32, i32) {
    %c0_i32 = arith.constant 0 : i32
    %c0_i32_0 = arith.constant 0 : i32
    %c0_i32_1 = arith.constant 0 : i32
    return %c0_i32, %c0_i32_0 : i32, i32
  }
  func.func @transform_9(%arg0: i32) -> (i32, i32) {
    %c0_i32 = arith.constant 0 : i32
    %c0_i32_0 = arith.constant 0 : i32
    %c0_i32_1 = arith.constant 0 : i32
    return %c0_i32, %c0_i32_0 : i32, i32
  }
  func.func @transform_10(%arg0: i32) -> (i32, i32) {
    %c0_i32 = arith.constant 0 : i32
    %c0_i32_0 = arith.constant 0 : i32
    %c0_i32_1 = arith.constant 0 : i32
    return %c0_i32, %c0_i32_0 : i32, i32
  }
  func.func @transform_11(%arg0: i32) -> (i32, i32) {
    %c0_i32 = arith.constant 0 : i32
    %c0_i32_0 = arith.constant 0 : i32
    %c0_i32_1 = arith.constant 0 : i32
    return %c0_i32, %c0_i32_0 : i32, i32
  }
  func.func @transform_12(%arg0: i32) -> (i32, i32) {
    %c0_i32 = arith.constant 0 : i32
    %c0_i32_0 = arith.constant 0 : i32
    %c0_i32_1 = arith.constant 0 : i32
    return %c0_i32, %c0_i32_0 : i32, i32
  }
  func.func @transform_13(%arg0: i32) -> (i32, i32) {
    %c0_i32 = arith.constant 0 : i32
    %c0_i32_0 = arith.constant 0 : i32
    %c0_i32_1 = arith.constant 0 : i32
    return %c0_i32, %c0_i32_0 : i32, i32
  }
  func.func @transform_14(%arg0: i32) -> (i32, i32) {
    %c0_i32 = arith.constant 0 : i32
    %c0_i32_0 = arith.constant 0 : i32
    %c0_i32_1 = arith.constant 0 : i32
    return %c0_i32, %c0_i32_0 : i32, i32
  }
  func.func @transform_15(%arg0: i32) -> (i32, i32) {
    %c0_i32 = arith.constant 0 : i32
    %c0_i32_0 = arith.constant 0 : i32
    return %arg0, %c0_i32 : i32, i32
  }
}

</mosaic_0001>

<llo_original>
// kernel: tpu_custom_call.1
$region0: #{tpu_custom_call.1}
  #allocation0 [shape = 'u32[]', space=smem, size = 0x4, offset = 0x4, fixed_abs, tag = 'smem constant byte address 0x4 - core index']
  #allocation1 [shape = 'u32[72,128]{1,0:T(1,128)}', space=vmem, size = 0x9000, scoped, tag = 'internal scratch']
  %s0 = inlined_call_operand.vmem [shape: s32[16,1], index: 0, kind: input, shape index: {}]
  %s1 = inlined_call_operand.vmem [shape: bf16[10,128], index: 1, kind: input, shape index: {}]
  %s2 = inlined_call_operand.vmem [shape: f32[3,128], index: 2, kind: input, shape index: {}]
  %s3 = inlined_call_operand.hbm [shape: bf16[128,256], index: 3, kind: input, shape index: {}]
  %s4 = inlined_call_operand.vmem [shape: f32[3,256], index: 4, kind: input, shape index: {}]
  %s5 = inlined_call_operand.hbm [shape: bf16[256,512], index: 5, kind: input, shape index: {}]
  %s6 = inlined_call_operand.vmem [shape: f32[3,512], index: 6, kind: input, shape index: {}]
  %s7 = inlined_call_operand.hbm [shape: bf16[512,256], index: 7, kind: input, shape index: {}]
  %s8 = inlined_call_operand.vmem [shape: f32[3,256], index: 8, kind: input, shape index: {}]
  %s9 = inlined_call_operand.hbm [shape: bf16[256,128], index: 9, kind: input, shape index: {}]
  %s10 = inlined_call_operand.vmem [shape: f32[3,128], index: 10, kind: input, shape index: {}]
  %s11 = inlined_call_operand.vmem [shape: bf16[128,64], index: 11, kind: input, shape index: {}]
  %s12 = inlined_call_operand.vmem [shape: f32[3,64], index: 12, kind: input, shape index: {}]
  %s13 = inlined_call_operand.vmem [shape: bf16[64,128], index: 13, kind: input, shape index: {}]
  %s14 = inlined_call_operand.vmem [shape: f32[1,128], index: 14, kind: input, shape index: {}]
  %s15 = inlined_call_operand.hbm [shape: f32[16,128], index: 15, kind: output, shape index: {}]
  %s16 = sld [smem:[#allocation0]]
  $region109: #{tpu_custom_call.1} parent=0
    _
  %s18 = ssub.s32 1, %s16
  %s19 = scalar_select 0, %s18, %s16
  $region1: #{tpu_custom_call.1} parent=0
    #allocation2 [shape = 'u8[65536]{0}', space=vmem, size = 0x10000, scoped, tag = 'input window, operand 3, single buffered']
    #allocation3 [shape = 's32[2]{0}', space=sflag, size = 0x8, scoped, tag = 'scoped memory for tpu_custom_call.1']
    #allocation4 [shape = 's32[2]{0}', space=sflag, size = 0x8, scoped, tag = 'scoped memory for tpu_custom_call.1']
    #allocation5 [shape = 'u8[262144]{0}', space=vmem, size = 0x40000, scoped, tag = 'input window, operand 5, single buffered']
    #allocation6 [shape = 's32[1]{0}', space=sflag, size = 0x4, scoped, tag = 'scoped memory for tpu_custom_call.1']
    #allocation7 [shape = 'u8[262144]{0}', space=vmem, size = 0x40000, scoped, tag = 'input window, operand 7, single buffered']
    #allocation8 [shape = 'u8[65536]{0}', space=vmem, size = 0x10000, scoped, tag = 'input window, operand 9, single buffered']
    #allocation9 [shape = 's32[1]{0}', space=sflag, size = 0x4, scoped, tag = 'scoped memory for tpu_custom_call.1']
    #allocation10 [shape = 'u8[8192]{0}', space=vmem, size = 0x2000, scoped, tag = 'output window, operand 0']
    %20 = vsyncpa [#allocation3], 0
    %21 = vsyncpa [#allocation6], 0
    %22 = vsyncpa [#allocation9], 0
    %23 = vsyncpa [#allocation4], 0
    %s24 = scalar_lea.sflag [#allocation4], 1
    %25 = vsyncpa %s24, 0
    loop: start=0, step=1, limit=4
    $region2: #{tpu_custom_call.1} parent=1 // loop_pre_header
      _
    $region3: #{tpu_custom_call.1} parent=1 // loop_header
      %s27 = sphi 0, %s31
      %p28 = scmp.ge.s32.totalorder %s27, 4
      %s37 = sphi 0, %s39
      %s40 = sphi 0, %s37
      %s41 = sphi 0, %s40
      %s57 = sphi 0, %s41
      %s61 = sphi 0, %s61
      %s63 = sphi 0, %s61
      %s64 = sphi 0, %s63
      %s78 = sphi 0, %s64
      %s82 = sphi 0, %s82
      %s84 = sphi 0, %s82
      %s85 = sphi 0, %s84
      %s99 = sphi 0, %s85
      %s103 = sphi 0, %s103
      %s105 = sphi 0, %s103
      %s106 = sphi 0, %s105
      %s120 = sphi 0, %s106
      %s124 = sphi 0, %s124
      %s126 = sphi 0, %s124
      %s127 = sphi 0, %s126
      %s141 = sphi 0, %s127
      %s145 = sphi 0, %s145
      %s147 = sphi 0, %s145
      %s148 = sphi 0, %s147
      %s162 = sphi 0, %s148
      %s166 = sphi 0, %s166
      %s168 = sphi 0, %s166
      %s169 = sphi 0, %s168
      %s183 = sphi 0, %s169
      %s187 = sphi 0, %s187
      %s189 = sphi 0, %s187
      %s190 = sphi 0, %s189
      %s204 = sphi 0, %s190
      %s208 = sphi 0, %s208
      %s210 = sphi 0, %s208
      %s211 = sphi 0, %s210
      %s225 = sphi 0, %s211
      %s229 = sphi 0, %s229
      %s231 = sphi 0, %s229
      %s232 = sphi 0, %s231
      %s246 = sphi 0, %s232
      %s250 = sphi 0, %s250
      %s252 = sphi 0, %s250
      %s253 = sphi 0, %s252
      %s267 = sphi 0, %s253
      %s271 = sphi 0, %s271
      %s273 = sphi 0, %s271
      %s274 = sphi 0, %s273
      %s288 = sphi 0, %s274
      %s292 = sphi 0, %s292
      %s294 = sphi 0, %s292
      %s295 = sphi 0, %s294
      %s309 = sphi 0, %s295
      %s313 = sphi 0, %s313
      %s315 = sphi 0, %s313
      %s316 = sphi 0, %s315
      %s330 = sphi 0, %s316
      %s334 = sphi 0, %s334
      %s336 = sphi 0, %s334
      %s337 = sphi 0, %s336
      %s351 = sphi 0, %s337
      %s357 = sphi 0, %s359
      %s360 = sphi 0, %s357
      %s361 = sphi 0, %s360
      %s377 = sphi 0, %s361
    $region4: #{tpu_custom_call.1} parent=1 // loop_header_branch
      %30 = sbr.rel (%p28) target = $region8
    $region5: #{tpu_custom_call.1} parent=1 // loop_body
      %s32 = ssub.s32 %s27, 1
      %s33 = ssub.s32 %s27, 2
      %s34 = sadd.s32 %s27, 1
      %s35 = ssub.s32 %s27, %s34
      %p36 = scmp.eq.s32.totalorder %s35, 0
      %s38 = sadd.s32 %s37, 1
      %s39 = scalar_select %p36, %s37, %s38
      %p42 = pneg %p36
      %p43 = scmp.eq.s32.totalorder %s27, 1
      %p44 = por %p42, %p43
      %p45 = scmp.ne.s32.totalorder %s37, %s40
      %p46 = scmp.eq.s32.totalorder %s27, 0
      %p47 = por %p45, %p46
      %p48 = scmp.ne.s32.totalorder %s37, %s40
      %p49 = scmp.eq.s32.totalorder %s32, 1
      %p50 = por %p48, %p49
      %p51 = scmp.ne.s32.totalorder %s40, %s41
      %p52 = scmp.eq.s32.totalorder %s32, 0
      %p53 = por %p51, %p52
      %p54 = scmp.ne.s32.totalorder %s40, %s41
      %p55 = scmp.eq.s32.totalorder %s33, 1
      %p56 = por %p54, %p55
      %p58 = scmp.ne.s32.totalorder %s41, %s57
      %p59 = scmp.eq.s32.totalorder %s33, 0
      %p60 = por %p58, %p59
      %s62 = sadd.s32 %s61, 1
      %p65 = scmp.eq.s32.totalorder %s27, 1
      %p66 = scmp.ne.s32.totalorder %s61, %s63
      %p67 = scmp.eq.s32.totalorder %s27, 0
      %p68 = por %p66, %p67
      %p69 = scmp.ne.s32.totalorder %s61, %s63
      %p70 = scmp.eq.s32.totalorder %s32, 1
      %p71 = por %p69, %p70
      %p72 = scmp.ne.s32.totalorder %s63, %s64
      %p73 = scmp.eq.s32.totalorder %s32, 0
      %p74 = por %p72, %p73
      %p75 = scmp.ne.s32.totalorder %s63, %s64
      %p76 = scmp.eq.s32.totalorder %s33, 1
      %p77 = por %p75, %p76
      %p79 = scmp.ne.s32.totalorder %s64, %s78
      %p80 = scmp.eq.s32.totalorder %s33, 0
      %p81 = por %p79, %p80
      %s83 = sadd.s32 %s82, 1
      %p86 = scmp.eq.s32.totalorder %s27, 1
      %p87 = scmp.ne.s32.totalorder %s82, %s84
      %p88 = scmp.eq.s32.totalorder %s27, 0
      %p89 = por %p87, %p88
      %p90 = scmp.ne.s32.totalorder %s82, %s84
      %p91 = scmp.eq.s32.totalorder %s32, 1
      %p92 = por %p90, %p91
      %p93 = scmp.ne.s32.totalorder %s84, %s85
      %p94 = scmp.eq.s32.totalorder %s32, 0
      %p95 = por %p93, %p94
      %p96 = scmp.ne.s32.totalorder %s84, %s85
      %p97 = scmp.eq.s32.totalorder %s33, 1
      %p98 = por %p96, %p97
      %p100 = scmp.ne.s32.totalorder %s85, %s99
      %p101 = scmp.eq.s32.totalorder %s33, 0
      %p102 = por %p100, %p101
      %s104 = sadd.s32 %s103, 1
      %p107 = scmp.eq.s32.totalorder %s27, 1
      %p108 = scmp.ne.s32.totalorder %s103, %s105
      %p109 = scmp.eq.s32.totalorder %s27, 0
      %p110 = por %p108, %p109
      %p111 = scmp.ne.s32.totalorder %s103, %s105
      %p112 = scmp.eq.s32.totalorder %s32, 1
      %p113 = por %p111, %p112
      %p114 = scmp.ne.s32.totalorder %s105, %s106
      %p115 = scmp.eq.s32.totalorder %s32, 0
      %p116 = por %p114, %p115
      %p117 = scmp.ne.s32.totalorder %s105, %s106
      %p118 = scmp.eq.s32.totalorder %s33, 1
      %p119 = por %p117, %p118
      %p121 = scmp.ne.s32.totalorder %s106, %s120
      %p122 = scmp.eq.s32.totalorder %s33, 0
      %p123 = por %p121, %p122
      %s125 = sadd.s32 %s124, 1
      %p128 = scmp.eq.s32.totalorder %s27, 1
      %p129 = scmp.ne.s32.totalorder %s124, %s126
      %p130 = scmp.eq.s32.totalorder %s27, 0
      %p131 = por %p129, %p130
      %p132 = scmp.ne.s32.totalorder %s124, %s126
      %p133 = scmp.eq.s32.totalorder %s32, 1
      %p134 = por %p132, %p133
      %p135 = scmp.ne.s32.totalorder %s126, %s127
      %p136 = scmp.eq.s32.totalorder %s32, 0
      %p137 = por %p135, %p136
      %p138 = scmp.ne.s32.totalorder %s126, %s127
      %p139 = scmp.eq.s32.totalorder %s33, 1
      %p140 = por %p138, %p139
      %p142 = scmp.ne.s32.totalorder %s127, %s141
      %p143 = scmp.eq.s32.totalorder %s33, 0
      %p144 = por %p142, %p143
      %s146 = sadd.s32 %s145, 1
      %p149 = scmp.eq.s32.totalorder %s27, 1
      %p150 = scmp.ne.s32.totalorder %s145, %s147
      %p151 = scmp.eq.s32.totalorder %s27, 0
      %p152 = por %p150, %p151
      %p153 = scmp.ne.s32.totalorder %s145, %s147
      %p154 = scmp.eq.s32.totalorder %s32, 1
      %p155 = por %p153, %p154
      %p156 = scmp.ne.s32.totalorder %s147, %s148
      %p157 = scmp.eq.s32.totalorder %s32, 0
      %p158 = por %p156, %p157
      %p159 = scmp.ne.s32.totalorder %s147, %s148
      %p160 = scmp.eq.s32.totalorder %s33, 1
      %p161 = por %p159, %p160
      %p163 = scmp.ne.s32.totalorder %s148, %s162
      %p164 = scmp.eq.s32.totalorder %s33, 0
      %p165 = por %p163, %p164
      %s167 = sadd.s32 %s166, 1
      %p170 = scmp.eq.s32.totalorder %s27, 1
      %p171 = scmp.ne.s32.totalorder %s166, %s168
      %p172 = scmp.eq.s32.totalorder %s27, 0
      %p173 = por %p171, %p172
      %p174 = scmp.ne.s32.totalorder %s166, %s168
      %p175 = scmp.eq.s32.totalorder %s32, 1
      %p176 = por %p174, %p175
      %p177 = scmp.ne.s32.totalorder %s168, %s169
      %p178 = scmp.eq.s32.totalorder %s32, 0
      %p179 = por %p177, %p178
      %p180 = scmp.ne.s32.totalorder %s168, %s169
      %p181 = scmp.eq.s32.totalorder %s33, 1
      %p182 = por %p180, %p181
      %p184 = scmp.ne.s32.totalorder %s169, %s183
      %p185 = scmp.eq.s32.totalorder %s33, 0
      %p186 = por %p184, %p185
      %s188 = sadd.s32 %s187, 1
      %p191 = scmp.eq.s32.totalorder %s27, 1
      %p192 = scmp.ne.s32.totalorder %s187, %s189
      %p193 = scmp.eq.s32.totalorder %s27, 0
      %p194 = por %p192, %p193
      %p195 = scmp.ne.s32.totalorder %s187, %s189
      %p196 = scmp.eq.s32.totalorder %s32, 1
      %p197 = por %p195, %p196
      %p198 = scmp.ne.s32.totalorder %s189, %s190
      %p199 = scmp.eq.s32.totalorder %s32, 0
      %p200 = por %p198, %p199
      %p201 = scmp.ne.s32.totalorder %s189, %s190
      %p202 = scmp.eq.s32.totalorder %s33, 1
      %p203 = por %p201, %p202
      %p205 = scmp.ne.s32.totalorder %s190, %s204
      %p206 = scmp.eq.s32.totalorder %s33, 0
      %p207 = por %p205, %p206
      %s209 = sadd.s32 %s208, 1
      %p212 = scmp.eq.s32.totalorder %s27, 1
      %p213 = scmp.ne.s32.totalorder %s208, %s210
      %p214 = scmp.eq.s32.totalorder %s27, 0
      %p215 = por %p213, %p214
      %p216 = scmp.ne.s32.totalorder %s208, %s210
      %p217 = scmp.eq.s32.totalorder %s32, 1
      %p218 = por %p216, %p217
      %p219 = scmp.ne.s32.totalorder %s210, %s211
      %p220 = scmp.eq.s32.totalorder %s32, 0
      %p221 = por %p219, %p220
      %p222 = scmp.ne.s32.totalorder %s210, %s211
      %p223 = scmp.eq.s32.totalorder %s33, 1
      %p224 = por %p222, %p223
      %p226 = scmp.ne.s32.totalorder %s211, %s225
      %p227 = scmp.eq.s32.totalorder %s33, 0
      %p228 = por %p226, %p227
      %s230 = sadd.s32 %s229, 1
      %p233 = scmp.eq.s32.totalorder %s27, 1
      %p234 = scmp.ne.s32.totalorder %s229, %s231
      %p235 = scmp.eq.s32.totalorder %s27, 0
      %p236 = por %p234, %p235
      %p237 = scmp.ne.s32.totalorder %s229, %s231
      %p238 = scmp.eq.s32.totalorder %s32, 1
      %p239 = por %p237, %p238
      %p240 = scmp.ne.s32.totalorder %s231, %s232
      %p241 = scmp.eq.s32.totalorder %s32, 0
      %p242 = por %p240, %p241
      %p243 = scmp.ne.s32.totalorder %s231, %s232
      %p244 = scmp.eq.s32.totalorder %s33, 1
      %p245 = por %p243, %p244
      %p247 = scmp.ne.s32.totalorder %s232, %s246
      %p248 = scmp.eq.s32.totalorder %s33, 0
      %p249 = por %p247, %p248
      %s251 = sadd.s32 %s250, 1
      %p254 = scmp.eq.s32.totalorder %s27, 1
      %p255 = scmp.ne.s32.totalorder %s250, %s252
      %p256 = scmp.eq.s32.totalorder %s27, 0
      %p257 = por %p255, %p256
      %p258 = scmp.ne.s32.totalorder %s250, %s252
      %p259 = scmp.eq.s32.totalorder %s32, 1
      %p260 = por %p258, %p259
      %p261 = scmp.ne.s32.totalorder %s252, %s253
      %p262 = scmp.eq.s32.totalorder %s32, 0
      %p263 = por %p261, %p262
      %p264 = scmp.ne.s32.totalorder %s252, %s253
      %p265 = scmp.eq.s32.totalorder %s33, 1
      %p266 = por %p264, %p265
      %p268 = scmp.ne.s32.totalorder %s253, %s267
      %p269 = scmp.eq.s32.totalorder %s33, 0
      %p270 = por %p268, %p269
      %s272 = sadd.s32 %s271, 1
      %p275 = scmp.eq.s32.totalorder %s27, 1
      %p276 = scmp.ne.s32.totalorder %s271, %s273
      %p277 = scmp.eq.s32.totalorder %s27, 0
      %p278 = por %p276, %p277
      %p279 = scmp.ne.s32.totalorder %s271, %s273
      %p280 = scmp.eq.s32.totalorder %s32, 1
      %p281 = por %p279, %p280
      %p282 = scmp.ne.s32.totalorder %s273, %s274
      %p283 = scmp.eq.s32.totalorder %s32, 0
      %p284 = por %p282, %p283
      %p285 = scmp.ne.s32.totalorder %s273, %s274
      %p286 = scmp.eq.s32.totalorder %s33, 1
      %p287 = por %p285, %p286
      %p289 = scmp.ne.s32.totalorder %s274, %s288
      %p290 = scmp.eq.s32.totalorder %s33, 0
      %p291 = por %p289, %p290
      %s293 = sadd.s32 %s292, 1
      %p296 = scmp.eq.s32.totalorder %s27, 1
      %p297 = scmp.ne.s32.totalorder %s292, %s294
      %p298 = scmp.eq.s32.totalorder %s27, 0
      %p299 = por %p297, %p298
      %p300 = scmp.ne.s32.totalorder %s292, %s294
      %p301 = scmp.eq.s32.totalorder %s32, 1
      %p302 = por %p300, %p301
      %p303 = scmp.ne.s32.totalorder %s294, %s295
      %p304 = scmp.eq.s32.totalorder %s32, 0
      %p305 = por %p303, %p304
      %p306 = scmp.ne.s32.totalorder %s294, %s295
      %p307 = scmp.eq.s32.totalorder %s33, 1
      %p308 = por %p306, %p307
      %p310 = scmp.ne.s32.totalorder %s295, %s309
      %p311 = scmp.eq.s32.totalorder %s33, 0
      %p312 = por %p310, %p311
      %s314 = sadd.s32 %s313, 1
      %p317 = scmp.eq.s32.totalorder %s27, 1
      %p318 = scmp.ne.s32.totalorder %s313, %s315
      %p319 = scmp.eq.s32.totalorder %s27, 0
      %p320 = por %p318, %p319
      %p321 = scmp.ne.s32.totalorder %s313, %s315
      %p322 = scmp.eq.s32.totalorder %s32, 1
      %p323 = por %p321, %p322
      %p324 = scmp.ne.s32.totalorder %s315, %s316
      %p325 = scmp.eq.s32.totalorder %s32, 0
      %p326 = por %p324, %p325
      %p327 = scmp.ne.s32.totalorder %s315, %s316
      %p328 = scmp.eq.s32.totalorder %s33, 1
      %p329 = por %p327, %p328
      %p331 = scmp.ne.s32.totalorder %s316, %s330
      %p332 = scmp.eq.s32.totalorder %s33, 0
      %p333 = por %p331, %p332
      %s335 = sadd.s32 %s334, 1
      %p338 = scmp.eq.s32.totalorder %s27, 1
      %p339 = scmp.ne.s32.totalorder %s334, %s336
      %p340 = scmp.eq.s32.totalorder %s27, 0
      %p341 = por %p339, %p340
      %p342 = scmp.ne.s32.totalorder %s334, %s336
      %p343 = scmp.eq.s32.totalorder %s32, 1
      %p344 = por %p342, %p343
      %p345 = scmp.ne.s32.totalorder %s336, %s337
      %p346 = scmp.eq.s32.totalorder %s32, 0
      %p347 = por %p345, %p346
      %p348 = scmp.ne.s32.totalorder %s336, %s337
      %p349 = scmp.eq.s32.totalorder %s33, 1
      %p350 = por %p348, %p349
      %p352 = scmp.ne.s32.totalorder %s337, %s351
      %p353 = scmp.eq.s32.totalorder %s33, 0
      %p354 = por %p352, %p353
      %s355 = ssub.s32 %s27, %s34
      %p356 = scmp.eq.s32.totalorder %s355, 0
      %s358 = sadd.s32 %s357, 1
      %s359 = scalar_select %p356, %s357, %s358
      %p362 = pneg %p356
      %p363 = scmp.eq.s32.totalorder %s27, 1
      %p364 = por %p362, %p363
      %p365 = scmp.ne.s32.totalorder %s357, %s360
      %p366 = scmp.eq.s32.totalorder %s27, 0
      %p367 = por %p365, %p366
      %p368 = scmp.ne.s32.totalorder %s357, %s360
      %p369 = scmp.eq.s32.totalorder %s32, 1
      %p370 = por %p368, %p369
      %p371 = scmp.ne.s32.totalorder %s360, %s361
      %p372 = scmp.eq.s32.totalorder %s32, 0
      %p373 = por %p371, %p372
      %p374 = scmp.ne.s32.totalorder %s360, %s361
      %p375 = scmp.eq.s32.totalorder %s33, 1
      %p376 = por %p374, %p375
      %p378 = scmp.ne.s32.totalorder %s361, %s377
      %p379 = scmp.eq.s32.totalorder %s33, 0
      %p380 = por %p378, %p379
      %p381 = scmp.le.s32.totalorder 1, %s27
      %p382 = scmp.lt.s32.totalorder %s27, 3
      %p383 = pnand %p381, %p382
      %p384 = pneg %p383
      // Predicated region
      $region9: #{tpu_custom_call.1} parent=5 // pred_check
        _
      $region10: #{tpu_custom_call.1} parent=5 // pred_check_branch
        %386 = sbr.rel (%p383) target = $region12
      $region11: #{tpu_custom_call.1} parent=5 // pred_region
        %s387 = ssub.s32 %s27, 1
        // Predicated region
        $region13: #{tpu_custom_call.1} parent=11 // pred_check
          %p388 = pneg %p74
        $region14: #{tpu_custom_call.1} parent=11 // pred_check_branch
          %390 = sbr.rel (%p388) target = $region16
        $region15: #{tpu_custom_call.1} parent=11 // pred_region
          _
        $region16: #{tpu_custom_call.1} parent=11 // pred_fallthru
          _
        // Predicated region
        $region17: #{tpu_custom_call.1} parent=11 // pred_check
          %p391 = pneg %p95
        $region18: #{tpu_custom_call.1} parent=11 // pred_check_branch
          %393 = sbr.rel (%p391) target = $region20
        $region19: #{tpu_custom_call.1} parent=11 // pred_region
          _
        $region20: #{tpu_custom_call.1} parent=11 // pred_fallthru
          _
        // Predicated region
        $region21: #{tpu_custom_call.1} parent=11 // pred_check
          %p394 = pneg %p116
        $region22: #{tpu_custom_call.1} parent=11 // pred_check_branch
          %396 = sbr.rel (%p394) target = $region24
        $region23: #{tpu_custom_call.1} parent=11 // pred_region
          %398 = vsyncadd [#allocation3], 0
          %s399 = sshll.u32 %s3, 4
          %s400 = int_to_ptr.hbm [resolvable:$true] %s399
          %s401 = sshll.u32 [#allocation2], 4
          %s402 = int_to_ptr.vmem [resolvable:$true] %s401
          %407 = dma.hbm_to_vmem [thread:$0]  %s400, 2048, %s402, [#allocation3], 128, 128, 8
        $region24: #{tpu_custom_call.1} parent=11 // pred_fallthru
          _
        // Predicated region
        $region25: #{tpu_custom_call.1} parent=11 // pred_check
          %p408 = pneg %p137
        $region26: #{tpu_custom_call.1} parent=11 // pred_check_branch
          %410 = sbr.rel (%p408) target = $region28
        $region27: #{tpu_custom_call.1} parent=11 // pred_region
          _
        $region28: #{tpu_custom_call.1} parent=11 // pred_fallthru
          _
        // Predicated region
        $region29: #{tpu_custom_call.1} parent=11 // pred_check
          %p411 = pneg %p158
        $region30: #{tpu_custom_call.1} parent=11 // pred_check_branch
          %413 = sbr.rel (%p411) target = $region32
        $region31: #{tpu_custom_call.1} parent=11 // pred_region
          %415 = vsyncadd [#allocation6], 0
          %s416 = sshll.u32 %s5, 4
          %s417 = int_to_ptr.hbm [resolvable:$true] %s416
          %s418 = sshll.u32 [#allocation5], 4
          %s419 = int_to_ptr.vmem [resolvable:$true] %s418
          %424 = dma.hbm_to_vmem [thread:$0]  %s417, 8192, %s419, [#allocation6], 256, 256, 16
        $region32: #{tpu_custom_call.1} parent=11 // pred_fallthru
          _
        // Predicated region
        $region33: #{tpu_custom_call.1} parent=11 // pred_check
          %p425 = pneg %p179
        $region34: #{tpu_custom_call.1} parent=11 // pred_check_branch
          %427 = sbr.rel (%p425) target = $region36
        $region35: #{tpu_custom_call.1} parent=11 // pred_region
          _
        $region36: #{tpu_custom_call.1} parent=11 // pred_fallthru
          _
        // Predicated region
        $region37: #{tpu_custom_call.1} parent=11 // pred_check
          %p428 = pneg %p200
        $region38: #{tpu_custom_call.1} parent=11 // pred_check_branch
          %430 = sbr.rel (%p428) target = $region40
        $region39: #{tpu_custom_call.1} parent=11 // pred_region
          %432 = vsyncadd [#allocation6], 0
          %s433 = sshll.u32 %s7, 4
          %s434 = int_to_ptr.hbm [resolvable:$true] %s433
          %s435 = sshll.u32 [#allocation7], 4
          %s436 = int_to_ptr.vmem [resolvable:$true] %s435
          %441 = dma.hbm_to_vmem [thread:$0]  %s434, 8192, %s436, [#allocation6], 128, 128, 8
        $region40: #{tpu_custom_call.1} parent=11 // pred_fallthru
          _
        // Predicated region
        $region41: #{tpu_custom_call.1} parent=11 // pred_check
          %p442 = pneg %p221
        $region42: #{tpu_custom_call.1} parent=11 // pred_check_branch
          %444 = sbr.rel (%p442) target = $region44
        $region43: #{tpu_custom_call.1} parent=11 // pred_region
          _
        $region44: #{tpu_custom_call.1} parent=11 // pred_fallthru
          _
        // Predicated region
        $region45: #{tpu_custom_call.1} parent=11 // pred_check
          %p445 = pneg %p242
        $region46: #{tpu_custom_call.1} parent=11 // pred_check_branch
          %447 = sbr.rel (%p445) target = $region48
        $region47: #{tpu_custom_call.1} parent=11 // pred_region
          %449 = vsyncadd [#allocation9], 0
          %s450 = sshll.u32 %s9, 4
          %s451 = int_to_ptr.hbm [resolvable:$true] %s450
          %s452 = sshll.u32 [#allocation8], 4
          %s453 = int_to_ptr.vmem [resolvable:$true] %s452
          %458 = dma.hbm_to_vmem [thread:$0]  %s451, 2048, %s453, [#allocation9], 64, 64, 4
        $region48: #{tpu_custom_call.1} parent=11 // pred_fallthru
          _
        // Predicated region
        $region49: #{tpu_custom_call.1} parent=11 // pred_check
          %p459 = pneg %p263
        $region50: #{tpu_custom_call.1} parent=11 // pred_check_branch
          %461 = sbr.rel (%p459) target = $region52
        $region51: #{tpu_custom_call.1} parent=11 // pred_region
          _
        $region52: #{tpu_custom_call.1} parent=11 // pred_fallthru
          _
        // Predicated region
        $region53: #{tpu_custom_call.1} parent=11 // pred_check
          %p462 = pneg %p284
        $region54: #{tpu_custom_call.1} parent=11 // pred_check_branch
          %464 = sbr.rel (%p462) target = $region56
        $region55: #{tpu_custom_call.1} parent=11 // pred_region
          _
        $region56: #{tpu_custom_call.1} parent=11 // pred_fallthru
          _
        // Predicated region
        $region57: #{tpu_custom_call.1} parent=11 // pred_check
          %p465 = pneg %p305
        $region58: #{tpu_custom_call.1} parent=11 // pred_check_branch
          %467 = sbr.rel (%p465) target = $region60
        $region59: #{tpu_custom_call.1} parent=11 // pred_region
          _
        $region60: #{tpu_custom_call.1} parent=11 // pred_fallthru
          _
        // Predicated region
        $region61: #{tpu_custom_call.1} parent=11 // pred_check
          %p468 = pneg %p326
        $region62: #{tpu_custom_call.1} parent=11 // pred_check_branch
          %470 = sbr.rel (%p468) target = $region64
        $region63: #{tpu_custom_call.1} parent=11 // pred_region
          _
        $region64: #{tpu_custom_call.1} parent=11 // pred_fallthru
          _
        // Predicated region
        $region65: #{tpu_custom_call.1} parent=11 // pred_check
          %p471 = pneg %p347
        $region66: #{tpu_custom_call.1} parent=11 // pred_check_branch
          %473 = sbr.rel (%p471) target = $region68
        $region67: #{tpu_custom_call.1} parent=11 // pred_region
          _
        $region68: #{tpu_custom_call.1} parent=11 // pred_fallthru
          _
      $region12: #{tpu_custom_call.1} parent=5 // pred_fallthru
        _
      %p474 = scmp.lt.s32.totalorder %s27, 2
      // Predicated region
      $region69: #{tpu_custom_call.1} parent=5 // pred_check
        %p475 = pneg %p474
      $region70: #{tpu_custom_call.1} parent=5 // pred_check_branch
        %477 = sbr.rel (%p475) target = $region72
      $region71: #{tpu_custom_call.1} parent=5 // pred_region
        // Predicated region
        $region73: #{tpu_custom_call.1} parent=71 // pred_check
          %p478 = pneg %p47
        $region74: #{tpu_custom_call.1} parent=71 // pred_check_branch
          %480 = sbr.rel (%p478) target = $region76
        $region75: #{tpu_custom_call.1} parent=71 // pred_region
          %p481 = scmp.lt.s32.totalorder %s27, 1
          %s482 = scalar_select %p481, %s27, 1
          %s483 = smul.addr %s482, 8
          %s484 = scalar_lea.vmem %s0, %s483
        $region76: #{tpu_custom_call.1} parent=71 // pred_fallthru
          _
      $region72: #{tpu_custom_call.1} parent=5 // pred_fallthru
        _
      %p485 = scmp.le.s32.totalorder 1, %s27
      %p486 = scmp.lt.s32.totalorder %s27, 3
      %p487 = pnand %p485, %p486
      %p488 = pneg %p487
      // Predicated region
      $region77: #{tpu_custom_call.1} parent=5 // pred_check
        _
      $region78: #{tpu_custom_call.1} parent=5 // pred_check_branch
        %490 = sbr.rel (%p487) target = $region80
      $region79: #{tpu_custom_call.1} parent=5 // pred_region
        %s491 = ssub.s32 %s27, 1
        // Predicated region
        $region81: #{tpu_custom_call.1} parent=79 // pred_check
          %p492 = pneg %p116
        $region82: #{tpu_custom_call.1} parent=79 // pred_check_branch
          %494 = sbr.rel (%p492) target = $region84
        $region83: #{tpu_custom_call.1} parent=79 // pred_region
          %496 = dma.done [#allocation3], 2048
        $region84: #{tpu_custom_call.1} parent=79 // pred_fallthru
          _
        // Predicated region
        $region85: #{tpu_custom_call.1} parent=79 // pred_check
          %p497 = pneg %p158
        $region86: #{tpu_custom_call.1} parent=79 // pred_check_branch
          %499 = sbr.rel (%p497) target = $region88
        $region87: #{tpu_custom_call.1} parent=79 // pred_region
          %501 = dma.done [#allocation6], 8192
        $region88: #{tpu_custom_call.1} parent=79 // pred_fallthru
          _
        // Predicated region
        $region89: #{tpu_custom_call.1} parent=79 // pred_check
          %p502 = pneg %p200
        $region90: #{tpu_custom_call.1} parent=79 // pred_check_branch
          %504 = sbr.rel (%p502) target = $region92
        $region91: #{tpu_custom_call.1} parent=79 // pred_region
          %506 = dma.done [#allocation6], 8192
        $region92: #{tpu_custom_call.1} parent=79 // pred_fallthru
          _
        // Predicated region
        $region93: #{tpu_custom_call.1} parent=79 // pred_check
          %p507 = pneg %p242
        $region94: #{tpu_custom_call.1} parent=79 // pred_check_branch
          %509 = sbr.rel (%p507) target = $region96
        $region95: #{tpu_custom_call.1} parent=79 // pred_region
          %511 = dma.done [#allocation9], 2048
        $region96: #{tpu_custom_call.1} parent=79 // pred_fallthru
          _
        %p512 = scmp.lt.s32.totalorder %s32, 1
        %s513 = scalar_select %p512, %s32, 1
        %s514 = smul.addr %s513, 8
        %s515 = scalar_lea.vmem %s0, %s514
        %p516 = pneg %p53
        %p517 = pneg %p50
        %p518 = pneg %p74
        %p519 = pneg %p71
        %p520 = pneg %p95
        %p521 = pneg %p92
        %p522 = pneg %p116
        %p523 = pneg %p113
        %p524 = pneg %p137
        %p525 = pneg %p134
        %p526 = pneg %p158
        %p527 = pneg %p155
        %p528 = pneg %p179
        %p529 = pneg %p176
        %p530 = pneg %p200
        %p531 = pneg %p197
        %p532 = pneg %p221
        %p533 = pneg %p218
        %p534 = pneg %p242
        %p535 = pneg %p239
        %p536 = pneg %p263
        %p537 = pneg %p260
        %p538 = pneg %p284
        %p539 = pneg %p281
        %p540 = pneg %p305
        %p541 = pneg %p302
        %p542 = pneg %p326
        %p543 = pneg %p323
        %p544 = pneg %p347
        %p545 = pneg %p344
        %p546 = pneg %p373
        %p547 = pneg %p370
        %s548 = sand.u32 %s360, 1
        %s549 = scalar_lea.sflag [#allocation4], %s548
        %s550 = sand.u32 %s360, 1
        %s551 = smul.addr %s550, 8
        %s552 = scalar_lea.vmem [#allocation10], %s551
        %p553 = scmp.lt.s32.totalorder %s32, 1
        %s554 = scalar_select %p553, %s32, 1
        %s555 = smul.addr %s554, 8
        %s556 = scalar_lea.vmem %s0, %s555
        %v558 = vld [vmem:[%s556] sm:$0xff]
        %v559 = vlaneseq
        %v560 = vand.u32 %v559, 127
        %561 = vset.pattern.permute.xlu0 0
        %562 = vperm.xlu0 %561, %v558
        %v563 = vpop.permute.xlu0 %562
        %vm564 = vcmp.eq.s32.totalorder %v560, %v563
        %v565 = vsel %vm564, 1, 0
        %v566 = vcvt.s32.f32 %v565
        %v567 = vpack.c.bf16 %v566, %v566
        %v568 = vld [vmem:[%s1] sm:$0xf]
        %v569 = vld [vmem:[%s1 + $0x4] sm:$0x1]
        %v570 = vld [vmem:[%s2] sm:$0x7]
        %v571 = vperm.slane %v570, 0
        %v574 = vunpack.c.l.b16 %v568
        %v575 = vunpack.c.l.b16 %v569
        %v576 = vpack.c.b16 %v575, %v574
        %vm577 = vcmask 80896
        %v579 = vsel %vm577, %v567, 0
        %vm581 = vcmask 1044480
        %v583 = vsel %vm581, %v576, 0
        %585 = vmatpush.bf16.msra.mxu0 0
        %586 = vmatpush.bf16.msra.mxu0 0
        %587 = vmatpush.bf16.msra.mxu0 0
        %588 = vmatpush.bf16.msra.mxu0 0
        %589 = vmatpush.bf16.msra.mxu0 0
        %590 = vmatpush.bf16.msra.mxu0 0
        %591 = vmatpush.bf16.msra.mxu0 0
        %592 = vmatpush.bf16.msra.mxu0 %v583
        %593 = vmatmul.bf16.gmra.mxu0 %v579
        %v594 = vpop.f32.mrf.mxu0
        %v595 = vadd.f32 %v571, %v594
        %v596 = vpop.f32.mrf.mxu0
        %597 = vdwg.mxu0
        %598 = vadd.xlane.f32.xlu0 %v595
        %v599 = vpop.xlane.xlu0 %598
        %v600 = vmul.f32 %v599, 0.0078125
        %v601 = vmul.f32 %v595, %v595
        %602 = vadd.xlane.f32.xlu0 %v601
        %v603 = vpop.xlane.xlu0 %602
        %v604 = vmul.f32 %v603, 0.0078125
        %v605 = vmul.f32 %v600, %v600
        %v606 = vsub.f32 %v604, %v605
        %v607 = vadd.f32 %v606, 1e-05
        %v608 = vrsqrt.pop %v607
        %v609 = vmul.f32 %v608, %v607
        %v610 = vmul.f32 %v609, %v608
        %v611 = vmul.f32 0.5, %v610
        %v612 = vsub.f32 1.5, %v611
        %v613 = vmul.f32 %v608, %v612
        %vm614 = vweird.f32 %v607
        %vm615 = vweird.f32 %v608
        %vm616 = vmor %vm614, %vm615
        %v617 = vsel %vm616, %v608, %v613
        %v618 = vsub.f32 %v595, %v600
        %v619 = vmul.f32 %v618, %v617
        %v620 = vperm.slane %v570, 1
        %v621 = vmul.f32 %v619, %v620
        %v622 = vperm.slane %v570, 2
        %v623 = vadd.f32 %v621, %v622
        %v624 = vmul.f32 %v623, %v623
        %v625 = vmul.f32 %v624, %v623
        %v626 = vmul.f32 %v625, 0.044715
        %v627 = vadd.f32 %v623, %v626
        %v628 = vmul.f32 %v627, 0.7978846
        %v629 = vmul.f32 %v623, 0.5
        %v630 = vtanh.pop %v628
        %v631 = vadd.f32 %v630, 1.0
        %v632 = vmul.f32 %v629, %v631
        %v633 = vpack.c.bf16 %v632, %v632
        %v634 = vld [vmem:[#allocation2] sm:$0xff]
        %v635 = vld [vmem:[#allocation2 + $0x8] sm:$0xff]
        %v636 = vld [vmem:[#allocation2 + $0x10] sm:$0xff]
        %v637 = vld [vmem:[#allocation2 + $0x18] sm:$0xff]
        %v638 = vld [vmem:[#allocation2 + $0x20] sm:$0xff]
        %v639 = vld [vmem:[#allocation2 + $0x28] sm:$0xff]
        %v640 = vld [vmem:[#allocation2 + $0x30] sm:$0xff]
        %v641 = vld [vmem:[#allocation2 + $0x38] sm:$0xff]
        %v642 = vld [vmem:[#allocation2 + $0x40] sm:$0xff]
        %v643 = vld [vmem:[#allocation2 + $0x48] sm:$0xff]
        %v644 = vld [vmem:[#allocation2 + $0x50] sm:$0xff]
        %v645 = vld [vmem:[#allocation2 + $0x58] sm:$0xff]
        %v646 = vld [vmem:[#allocation2 + $0x60] sm:$0xff]
        %v647 = vld [vmem:[#allocation2 + $0x68] sm:$0xff]
        %v648 = vld [vmem:[#allocation2 + $0x70] sm:$0xff]
        %v649 = vld [vmem:[#allocation2 + $0x78] sm:$0xff]
        %v650 = vld [vmem:[%s4] sm:$0x77]
        %v652 = vperm.slane %v650, 0
        %v653 = vperm.slane %v650, 4
        %v656 = vperm.slane %v652, 0
        %v657 = vperm.slane %v653, 0
        %v674 = vunpack.c.l.b16 %v634
        %v675 = vunpack.c.h.b16 %v634
        %v676 = vunpack.c.l.b16 %v635
        %v677 = vunpack.c.h.b16 %v635
        %v678 = vunpack.c.l.b16 %v636
        %v679 = vunpack.c.h.b16 %v636
        %v680 = vunpack.c.l.b16 %v637
        %v681 = vunpack.c.h.b16 %v637
        %v682 = vunpack.c.l.b16 %v638
        %v683 = vunpack.c.h.b16 %v638
        %v684 = vunpack.c.l.b16 %v639
        %v685 = vunpack.c.h.b16 %v639
        %v686 = vunpack.c.l.b16 %v640
        %v687 = vunpack.c.h.b16 %v640
        %v688 = vunpack.c.l.b16 %v641
        %v689 = vunpack.c.h.b16 %v641
        %v690 = vunpack.c.l.b16 %v642
        %v691 = vunpack.c.h.b16 %v642
        %v692 = vunpack.c.l.b16 %v643
        %v693 = vunpack.c.h.b16 %v643
        %v694 = vunpack.c.l.b16 %v644
        %v695 = vunpack.c.h.b16 %v644
        %v696 = vunpack.c.l.b16 %v645
        %v697 = vunpack.c.h.b16 %v645
        %v698 = vunpack.c.l.b16 %v646
        %v699 = vunpack.c.h.b16 %v646
        %v700 = vunpack.c.l.b16 %v647
        %v701 = vunpack.c.h.b16 %v647
        %v702 = vunpack.c.l.b16 %v648
        %v703 = vunpack.c.h.b16 %v648
        %v704 = vunpack.c.l.b16 %v649
        %v705 = vunpack.c.h.b16 %v649
        %v706 = vpack.c.b16 %v676, %v674
        %v707 = vpack.c.b16 %v677, %v675
        %v708 = vpack.c.b16 %v680, %v678
        %v709 = vpack.c.b16 %v681, %v679
        %v710 = vpack.c.b16 %v684, %v682
        %v711 = vpack.c.b16 %v685, %v683
        %v712 = vpack.c.b16 %v688, %v686
        %v713 = vpack.c.b16 %v689, %v687
        %v714 = vpack.c.b16 %v692, %v690
        %v715 = vpack.c.b16 %v693, %v691
        %v716 = vpack.c.b16 %v696, %v694
        %v717 = vpack.c.b16 %v697, %v695
        %v718 = vpack.c.b16 %v700, %v698
        %v719 = vpack.c.b16 %v701, %v699
        %v720 = vpack.c.b16 %v704, %v702
        %v721 = vpack.c.b16 %v705, %v703
        %738 = vmatpush.bf16.msra.mxu0 %v720
        %739 = vmatpush.bf16.msra.mxu0 %v718
        %740 = vmatpush.bf16.msra.mxu0 %v716
        %741 = vmatpush.bf16.msra.mxu0 %v714
        %742 = vmatpush.bf16.msra.mxu0 %v712
        %743 = vmatpush.bf16.msra.mxu0 %v710
        %744 = vmatpush.bf16.msra.mxu0 %v708
        %745 = vmatpush.bf16.msra.mxu0 %v706
        %746 = vmatmul.bf16.gmra.mxu0 %v633
        %v747 = vpop.f32.mrf.mxu0
        %v748 = vadd.f32 %v656, %v747
        %v749 = vpop.f32.mrf.mxu0
        %750 = vdwg.mxu0
        %751 = vmatpush.bf16.msra.mxu0 %v721
        %752 = vmatpush.bf16.msra.mxu0 %v719
        %753 = vmatpush.bf16.msra.mxu0 %v717
        %754 = vmatpush.bf16.msra.mxu0 %v715
        %755 = vmatpush.bf16.msra.mxu0 %v713
        %756 = vmatpush.bf16.msra.mxu0 %v711
        %757 = vmatpush.bf16.msra.mxu0 %v709
        %758 = vmatpush.bf16.msra.mxu0 %v707
        %759 = vmatmul.bf16.gmra.mxu0 %v633
        %v760 = vpop.f32.mrf.mxu0
        %v761 = vadd.f32 %v657, %v760
        %v762 = vpop.f32.mrf.mxu0
        %763 = vdwg.mxu0
        %v764 = vadd.f32 %v748, %v761
        %765 = vadd.xlane.f32.xlu0 %v764
        %v766 = vpop.xlane.xlu0 %765
        %v767 = vmul.f32 %v766, 0.00390625
        %v768 = vmul.f32 %v748, %v748
        %v769 = vmul.f32 %v761, %v761
        %v770 = vadd.f32 %v768, %v769
        %771 = vadd.xlane.f32.xlu0 %v770
        %v772 = vpop.xlane.xlu0 %771
        %v773 = vmul.f32 %v772, 0.00390625
        %v774 = vmul.f32 %v767, %v767
        %v775 = vsub.f32 %v773, %v774
        %v776 = vadd.f32 %v775, 1e-05
        %v777 = vrsqrt.pop %v776
        %v778 = vmul.f32 %v777, %v776
        %v779 = vmul.f32 %v778, %v777
        %v780 = vmul.f32 0.5, %v779
        %v781 = vsub.f32 1.5, %v780
        %v782 = vmul.f32 %v777, %v781
        %vm783 = vweird.f32 %v776
        %vm784 = vweird.f32 %v777
        %vm785 = vmor %vm783, %vm784
        %v786 = vsel %vm785, %v777, %v782
        %v787 = vsub.f32 %v748, %v767
        %v788 = vsub.f32 %v761, %v767
        %v789 = vmul.f32 %v787, %v786
        %v790 = vmul.f32 %v788, %v786
        %v791 = vperm.slane %v650, 1
        %v792 = vperm.slane %v650, 5
        %v795 = vperm.slane %v791, 1
        %v796 = vperm.slane %v792, 1
        %v797 = vmul.f32 %v789, %v795
        %v798 = vmul.f32 %v790, %v796
        %v799 = vperm.slane %v650, 2
        %v800 = vperm.slane %v650, 6
        %v803 = vperm.slane %v799, 2
        %v804 = vperm.slane %v800, 2
        %v805 = vadd.f32 %v797, %v803
        %v806 = vadd.f32 %v798, %v804
        %v807 = vmul.f32 %v805, %v805
        %v808 = vmul.f32 %v806, %v806
        %v809 = vmul.f32 %v807, %v805
        %v810 = vmul.f32 %v808, %v806
        %v811 = vmul.f32 %v809, 0.044715
        %v812 = vmul.f32 %v810, 0.044715
        %v813 = vadd.f32 %v805, %v811
        %v814 = vadd.f32 %v806, %v812
        %v815 = vmul.f32 %v813, 0.7978846
        %v816 = vmul.f32 %v814, 0.7978846
        %v817 = vmul.f32 %v805, 0.5
        %v818 = vmul.f32 %v806, 0.5
        %v819 = vtanh.pop %v815
        %v820 = vtanh.pop %v816
        %v821 = vadd.f32 %v819, 1.0
        %v822 = vadd.f32 %v820, 1.0
        %v823 = vmul.f32 %v817, %v821
        %v824 = vmul.f32 %v818, %v822
        %v825 = vpack.c.bf16 %v823, %v823
        %v826 = vpack.c.bf16 %v824, %v824
        %v827 = vld [vmem:[#allocation5] sm:$0xff]
        %v828 = vld [vmem:[#allocation5 + $0x8] sm:$0xff]
        %v829 = vld [vmem:[#allocation5 + $0x10] sm:$0xff]
        %v830 = vld [vmem:[#allocation5 + $0x18] sm:$0xff]
        %v831 = vld [vmem:[#allocation5 + $0x20] sm:$0xff]
        %v832 = vld [vmem:[#allocation5 + $0x28] sm:$0xff]
        %v833 = vld [vmem:[#allocation5 + $0x30] sm:$0xff]
        %v834 = vld [vmem:[#allocation5 + $0x38] sm:$0xff]
        %v835 = vld [vmem:[#allocation5 + $0x40] sm:$0xff]
        %v836 = vld [vmem:[#allocation5 + $0x48] sm:$0xff]
        %v837 = vld [vmem:[#allocation5 + $0x50] sm:$0xff]
        %v838 = vld [vmem:[#allocation5 + $0x58] sm:$0xff]
        %v839 = vld [vmem:[#allocation5 + $0x60] sm:$0xff]
        %v840 = vld [vmem:[#allocation5 + $0x68] sm:$0xff]
        %v841 = vld [vmem:[#allocation5 + $0x70] sm:$0xff]
        %v842 = vld [vmem:[#allocation5 + $0x78] sm:$0xff]
        %v843 = vld [vmem:[#allocation5 + $0x80] sm:$0xff]
        %v844 = vld [vmem:[#allocation5 + $0x88] sm:$0xff]
        %v845 = vld [vmem:[#allocation5 + $0x90] sm:$0xff]
        %v846 = vld [vmem:[#allocation5 + $0x98] sm:$0xff]
        %v847 = vld [vmem:[#allocation5 + $0xa0] sm:$0xff]
        %v848 = vld [vmem:[#allocation5 + $0xa8] sm:$0xff]
        %v849 = vld [vmem:[#allocation5 + $0xb0] sm:$0xff]
        %v850 = vld [vmem:[#allocation5 + $0xb8] sm:$0xff]
        %v851 = vld [vmem:[#allocation5 + $0xc0] sm:$0xff]
        %v852 = vld [vmem:[#allocation5 + $0xc8] sm:$0xff]
        %v853 = vld [vmem:[#allocation5 + $0xd0] sm:$0xff]
        %v854 = vld [vmem:[#allocation5 + $0xd8] sm:$0xff]
        %v855 = vld [vmem:[#allocation5 + $0xe0] sm:$0xff]
        %v856 = vld [vmem:[#allocation5 + $0xe8] sm:$0xff]
        %v857 = vld [vmem:[#allocation5 + $0xf0] sm:$0xff]
        %v858 = vld [vmem:[#allocation5 + $0xf8] sm:$0xff]
        %v859 = vld [vmem:[#allocation5 + $0x100] sm:$0xff]
        %v860 = vld [vmem:[#allocation5 + $0x108] sm:$0xff]
        %v861 = vld [vmem:[#allocation5 + $0x110] sm:$0xff]
        %v862 = vld [vmem:[#allocation5 + $0x118] sm:$0xff]
        %v863 = vld [vmem:[#allocation5 + $0x120] sm:$0xff]
        %v864 = vld [vmem:[#allocation5 + $0x128] sm:$0xff]
        %v865 = vld [vmem:[#allocation5 + $0x130] sm:$0xff]
        %v866 = vld [vmem:[#allocation5 + $0x138] sm:$0xff]
        %v867 = vld [vmem:[#allocation5 + $0x140] sm:$0xff]
        %v868 = vld [vmem:[#allocation5 + $0x148] sm:$0xff]
        %v869 = vld [vmem:[#allocation5 + $0x150] sm:$0xff]
        %v870 = vld [vmem:[#allocation5 + $0x158] sm:$0xff]
        %v871 = vld [vmem:[#allocation5 + $0x160] sm:$0xff]
        %v872 = vld [vmem:[#allocation5 + $0x168] sm:$0xff]
        %v873 = vld [vmem:[#allocation5 + $0x170] sm:$0xff]
        %v874 = vld [vmem:[#allocation5 + $0x178] sm:$0xff]
        %v875 = vld [vmem:[#allocation5 + $0x180] sm:$0xff]
        %v876 = vld [vmem:[#allocation5 + $0x188] sm:$0xff]
        %v877 = vld [vmem:[#allocation5 + $0x190] sm:$0xff]
        %v878 = vld [vmem:[#allocation5 + $0x198] sm:$0xff]
        %v879 = vld [vmem:[#allocation5 + $0x1a0] sm:$0xff]
        %v880 = vld [vmem:[#allocation5 + $0x1a8] sm:$0xff]
        %v881 = vld [vmem:[#allocation5 + $0x1b0] sm:$0xff]
        %v882 = vld [vmem:[#allocation5 + $0x1b8] sm:$0xff]
        %v883 = vld [vmem:[#allocation5 + $0x1c0] sm:$0xff]
        %v884 = vld [vmem:[#allocation5 + $0x1c8] sm:$0xff]
        %v885 = vld [vmem:[#allocation5 + $0x1d0] sm:$0xff]
        %v886 = vld [vmem:[#allocation5 + $0x1d8] sm:$0xff]
        %v887 = vld [vmem:[#allocation5 + $0x1e0] sm:$0xff]
        %v888 = vld [vmem:[#allocation5 + $0x1e8] sm:$0xff]
        %v889 = vld [vmem:[#allocation5 + $0x1f0] sm:$0xff]
        %v890 = vld [vmem:[#allocation5 + $0x1f8] sm:$0xff]
        %v891 = vld [vmem:[%s6] sm:$0x77]
        %v892 = vld [vmem:[%s6 + $0x8] sm:$0x77]
        %v895 = vperm.slane %v891, 0
        %v896 = vperm.slane %v891, 4
        %v897 = vperm.slane %v892, 0
        %v898 = vperm.slane %v892, 4
        %v903 = vperm.slane %v895, 0
        %v904 = vperm.slane %v896, 0
        %v905 = vperm.slane %v897, 0
        %v906 = vperm.slane %v898, 0
        %v971 = vunpack.c.l.b16 %v827
        %v972 = vunpack.c.h.b16 %v827
        %v973 = vunpack.c.l.b16 %v828
        %v974 = vunpack.c.h.b16 %v828
        %v975 = vunpack.c.l.b16 %v829
        %v976 = vunpack.c.h.b16 %v829
        %v977 = vunpack.c.l.b16 %v830
        %v978 = vunpack.c.h.b16 %v830
        %v979 = vunpack.c.l.b16 %v831
        %v980 = vunpack.c.h.b16 %v831
        %v981 = vunpack.c.l.b16 %v832
        %v982 = vunpack.c.h.b16 %v832
        %v983 = vunpack.c.l.b16 %v833
        %v984 = vunpack.c.h.b16 %v833
        %v985 = vunpack.c.l.b16 %v834
        %v986 = vunpack.c.h.b16 %v834
        %v987 = vunpack.c.l.b16 %v835
        %v988 = vunpack.c.h.b16 %v835
        %v989 = vunpack.c.l.b16 %v836
        %v990 = vunpack.c.h.b16 %v836
        %v991 = vunpack.c.l.b16 %v837
        %v992 = vunpack.c.h.b16 %v837
        %v993 = vunpack.c.l.b16 %v838
        %v994 = vunpack.c.h.b16 %v838
        %v995 = vunpack.c.l.b16 %v839
        %v996 = vunpack.c.h.b16 %v839
        %v997 = vunpack.c.l.b16 %v840
        %v998 = vunpack.c.h.b16 %v840
        %v999 = vunpack.c.l.b16 %v841
        %v1000 = vunpack.c.h.b16 %v841
        %v1001 = vunpack.c.l.b16 %v842
        %v1002 = vunpack.c.h.b16 %v842
        %v1003 = vunpack.c.l.b16 %v843
        %v1004 = vunpack.c.h.b16 %v843
        %v1005 = vunpack.c.l.b16 %v844
        %v1006 = vunpack.c.h.b16 %v844
        %v1007 = vunpack.c.l.b16 %v845
        %v1008 = vunpack.c.h.b16 %v845
        %v1009 = vunpack.c.l.b16 %v846
        %v1010 = vunpack.c.h.b16 %v846
        %v1011 = vunpack.c.l.b16 %v847
        %v1012 = vunpack.c.h.b16 %v847
        %v1013 = vunpack.c.l.b16 %v848
        %v1014 = vunpack.c.h.b16 %v848
        %v1015 = vunpack.c.l.b16 %v849
        %v1016 = vunpack.c.h.b16 %v849
        %v1017 = vunpack.c.l.b16 %v850
        %v1018 = vunpack.c.h.b16 %v850
        %v1019 = vunpack.c.l.b16 %v851
        %v1020 = vunpack.c.h.b16 %v851
        %v1021 = vunpack.c.l.b16 %v852
        %v1022 = vunpack.c.h.b16 %v852
        %v1023 = vunpack.c.l.b16 %v853
        %v1024 = vunpack.c.h.b16 %v853
        %v1025 = vunpack.c.l.b16 %v854
        %v1026 = vunpack.c.h.b16 %v854
        %v1027 = vunpack.c.l.b16 %v855
        %v1028 = vunpack.c.h.b16 %v855
        %v1029 = vunpack.c.l.b16 %v856
        %v1030 = vunpack.c.h.b16 %v856
        %v1031 = vunpack.c.l.b16 %v857
        %v1032 = vunpack.c.h.b16 %v857
        %v1033 = vunpack.c.l.b16 %v858
        %v1034 = vunpack.c.h.b16 %v858
        %v1035 = vunpack.c.l.b16 %v859
        %v1036 = vunpack.c.h.b16 %v859
        %v1037 = vunpack.c.l.b16 %v860
        %v1038 = vunpack.c.h.b16 %v860
        %v1039 = vunpack.c.l.b16 %v861
        %v1040 = vunpack.c.h.b16 %v861
        %v1041 = vunpack.c.l.b16 %v862
        %v1042 = vunpack.c.h.b16 %v862
        %v1043 = vunpack.c.l.b16 %v863
        %v1044 = vunpack.c.h.b16 %v863
        %v1045 = vunpack.c.l.b16 %v864
        %v1046 = vunpack.c.h.b16 %v864
        %v1047 = vunpack.c.l.b16 %v865
        %v1048 = vunpack.c.h.b16 %v865
        %v1049 = vunpack.c.l.b16 %v866
        %v1050 = vunpack.c.h.b16 %v866
        %v1051 = vunpack.c.l.b16 %v867
        %v1052 = vunpack.c.h.b16 %v867
        %v1053 = vunpack.c.l.b16 %v868
        %v1054 = vunpack.c.h.b16 %v868
        %v1055 = vunpack.c.l.b16 %v869
        %v1056 = vunpack.c.h.b16 %v869
        %v1057 = vunpack.c.l.b16 %v870
        %v1058 = vunpack.c.h.b16 %v870
        %v1059 = vunpack.c.l.b16 %v871
        %v1060 = vunpack.c.h.b16 %v871
        %v1061 = vunpack.c.l.b16 %v872
        %v1062 = vunpack.c.h.b16 %v872
        %v1063 = vunpack.c.l.b16 %v873
        %v1064 = vunpack.c.h.b16 %v873
        %v1065 = vunpack.c.l.b16 %v874
        %v1066 = vunpack.c.h.b16 %v874
        %v1067 = vunpack.c.l.b16 %v875
        %v1068 = vunpack.c.h.b16 %v875
        %v1069 = vunpack.c.l.b16 %v876
        %v1070 = vunpack.c.h.b16 %v876
        %v1071 = vunpack.c.l.b16 %v877
        %v1072 = vunpack.c.h.b16 %v877
        %v1073 = vunpack.c.l.b16 %v878
        %v1074 = vunpack.c.h.b16 %v878
        %v1075 = vunpack.c.l.b16 %v879
        %v1076 = vunpack.c.h.b16 %v879
        %v1077 = vunpack.c.l.b16 %v880
        %v1078 = vunpack.c.h.b16 %v880
        %v1079 = vunpack.c.l.b16 %v881
        %v1080 = vunpack.c.h.b16 %v881
        %v1081 = vunpack.c.l.b16 %v882
        %v1082 = vunpack.c.h.b16 %v882
        %v1083 = vunpack.c.l.b16 %v883
        %v1084 = vunpack.c.h.b16 %v883
        %v1085 = vunpack.c.l.b16 %v884
        %v1086 = vunpack.c.h.b16 %v884
        %v1087 = vunpack.c.l.b16 %v885
        %v1088 = vunpack.c.h.b16 %v885
        %v1089 = vunpack.c.l.b16 %v886
        %v1090 = vunpack.c.h.b16 %v886
        %v1091 = vunpack.c.l.b16 %v887
        %v1092 = vunpack.c.h.b16 %v887
        %v1093 = vunpack.c.l.b16 %v888
        %v1094 = vunpack.c.h.b16 %v888
        %v1095 = vunpack.c.l.b16 %v889
        %v1096 = vunpack.c.h.b16 %v889
        %v1097 = vunpack.c.l.b16 %v890
        %v1098 = vunpack.c.h.b16 %v890
        %v1099 = vpack.c.b16 %v975, %v971
        %v1100 = vpack.c.b16 %v976, %v972
        %v1101 = vpack.c.b16 %v977, %v973
        %v1102 = vpack.c.b16 %v978, %v974
        %v1103 = vpack.c.b16 %v983, %v979
        %v1104 = vpack.c.b16 %v984, %v980
        %v1105 = vpack.c.b16 %v985, %v981
        %v1106 = vpack.c.b16 %v986, %v982
        %v1107 = vpack.c.b16 %v991, %v987
        %v1108 = vpack.c.b16 %v992, %v988
        %v1109 = vpack.c.b16 %v993, %v989
        %v1110 = vpack.c.b16 %v994, %v990
        %v1111 = vpack.c.b16 %v999, %v995
        %v1112 = vpack.c.b16 %v1000, %v996
        %v1113 = vpack.c.b16 %v1001, %v997
        %v1114 = vpack.c.b16 %v1002, %v998
        %v1115 = vpack.c.b16 %v1007, %v1003
        %v1116 = vpack.c.b16 %v1008, %v1004
        %v1117 = vpack.c.b16 %v1009, %v1005
        %v1118 = vpack.c.b16 %v1010, %v1006
        %v1119 = vpack.c.b16 %v1015, %v1011
        %v1120 = vpack.c.b16 %v1016, %v1012
        %v1121 = vpack.c.b16 %v1017, %v1013
        %v1122 = vpack.c.b16 %v1018, %v1014
        %v1123 = vpack.c.b16 %v1023, %v1019
        %v1124 = vpack.c.b16 %v1024, %v1020
        %v1125 = vpack.c.b16 %v1025, %v1021
        %v1126 = vpack.c.b16 %v1026, %v1022
        %v1127 = vpack.c.b16 %v1031, %v1027
        %v1128 = vpack.c.b16 %v1032, %v1028
        %v1129 = vpack.c.b16 %v1033, %v1029
        %v1130 = vpack.c.b16 %v1034, %v1030
        %v1131 = vpack.c.b16 %v1039, %v1035
        %v1132 = vpack.c.b16 %v1040, %v1036
        %v1133 = vpack.c.b16 %v1041, %v1037
        %v1134 = vpack.c.b16 %v1042, %v1038
        %v1135 = vpack.c.b16 %v1047, %v1043
        %v1136 = vpack.c.b16 %v1048, %v1044
        %v1137 = vpack.c.b16 %v1049, %v1045
        %v1138 = vpack.c.b16 %v1050, %v1046
        %v1139 = vpack.c.b16 %v1055, %v1051
        %v1140 = vpack.c.b16 %v1056, %v1052
        %v1141 = vpack.c.b16 %v1057, %v1053
        %v1142 = vpack.c.b16 %v1058, %v1054
        %v1143 = vpack.c.b16 %v1063, %v1059
        %v1144 = vpack.c.b16 %v1064, %v1060
        %v1145 = vpack.c.b16 %v1065, %v1061
        %v1146 = vpack.c.b16 %v1066, %v1062
        %v1147 = vpack.c.b16 %v1071, %v1067
        %v1148 = vpack.c.b16 %v1072, %v1068
        %v1149 = vpack.c.b16 %v1073, %v1069
        %v1150 = vpack.c.b16 %v1074, %v1070
        %v1151 = vpack.c.b16 %v1079, %v1075
        %v1152 = vpack.c.b16 %v1080, %v1076
        %v1153 = vpack.c.b16 %v1081, %v1077
        %v1154 = vpack.c.b16 %v1082, %v1078
        %v1155 = vpack.c.b16 %v1087, %v1083
        %v1156 = vpack.c.b16 %v1088, %v1084
        %v1157 = vpack.c.b16 %v1089, %v1085
        %v1158 = vpack.c.b16 %v1090, %v1086
        %v1159 = vpack.c.b16 %v1095, %v1091
        %v1160 = vpack.c.b16 %v1096, %v1092
        %v1161 = vpack.c.b16 %v1097, %v1093
        %v1162 = vpack.c.b16 %v1098, %v1094
        %1227 = vmatpush.bf16.msra.mxu0 %v1127
        %1228 = vmatpush.bf16.msra.mxu0 %v1123
        %1229 = vmatpush.bf16.msra.mxu0 %v1119
        %1230 = vmatpush.bf16.msra.mxu0 %v1115
        %1231 = vmatpush.bf16.msra.mxu0 %v1111
        %1232 = vmatpush.bf16.msra.mxu0 %v1107
        %1233 = vmatpush.bf16.msra.mxu0 %v1103
        %1234 = vmatpush.bf16.msra.mxu0 %v1099
        %1235 = vmatmul.bf16.gmra.mxu0 %v825
        %v1236 = vpop.f32.mrf.mxu0
        %v1237 = vadd.f32 %v903, %v1236
        %v1238 = vpop.f32.mrf.mxu0
        %1239 = vdwg.mxu0
        %1240 = vmatpush.bf16.msra.mxu0 %v1159
        %1241 = vmatpush.bf16.msra.mxu0 %v1155
        %1242 = vmatpush.bf16.msra.mxu0 %v1151
        %1243 = vmatpush.bf16.msra.mxu0 %v1147
        %1244 = vmatpush.bf16.msra.mxu0 %v1143
        %1245 = vmatpush.bf16.msra.mxu0 %v1139
        %1246 = vmatpush.bf16.msra.mxu0 %v1135
        %1247 = vmatpush.bf16.msra.mxu0 %v1131
        %1248 = vmatmul.bf16.gmra.mxu0 %v826
        %v1249 = vpop.f32.mrf.mxu0
        %v1250 = vadd.f32 %v1237, %v1249
        %v1251 = vpop.f32.mrf.mxu0
        %1252 = vdwg.mxu0
        %1253 = vmatpush.bf16.msra.mxu0 %v1128
        %1254 = vmatpush.bf16.msra.mxu0 %v1124
        %1255 = vmatpush.bf16.msra.mxu0 %v1120
        %1256 = vmatpush.bf16.msra.mxu0 %v1116
        %1257 = vmatpush.bf16.msra.mxu0 %v1112
        %1258 = vmatpush.bf16.msra.mxu0 %v1108
        %1259 = vmatpush.bf16.msra.mxu0 %v1104
        %1260 = vmatpush.bf16.msra.mxu0 %v1100
        %1261 = vmatmul.bf16.gmra.mxu0 %v825
        %v1262 = vpop.f32.mrf.mxu0
        %v1263 = vadd.f32 %v904, %v1262
        %v1264 = vpop.f32.mrf.mxu0
        %1265 = vdwg.mxu0
        %1266 = vmatpush.bf16.msra.mxu0 %v1160
        %1267 = vmatpush.bf16.msra.mxu0 %v1156
        %1268 = vmatpush.bf16.msra.mxu0 %v1152
        %1269 = vmatpush.bf16.msra.mxu0 %v1148
        %1270 = vmatpush.bf16.msra.mxu0 %v1144
        %1271 = vmatpush.bf16.msra.mxu0 %v1140
        %1272 = vmatpush.bf16.msra.mxu0 %v1136
        %1273 = vmatpush.bf16.msra.mxu0 %v1132
        %1274 = vmatmul.bf16.gmra.mxu0 %v826
        %v1275 = vpop.f32.mrf.mxu0
        %v1276 = vadd.f32 %v1263, %v1275
        %v1277 = vpop.f32.mrf.mxu0
        %1278 = vdwg.mxu0
        %1279 = vmatpush.bf16.msra.mxu0 %v1129
        %1280 = vmatpush.bf16.msra.mxu0 %v1125
        %1281 = vmatpush.bf16.msra.mxu0 %v1121
        %1282 = vmatpush.bf16.msra.mxu0 %v1117
        %1283 = vmatpush.bf16.msra.mxu0 %v1113
        %1284 = vmatpush.bf16.msra.mxu0 %v1109
        %1285 = vmatpush.bf16.msra.mxu0 %v1105
        %1286 = vmatpush.bf16.msra.mxu0 %v1101
        %1287 = vmatmul.bf16.gmra.mxu0 %v825
        %v1288 = vpop.f32.mrf.mxu0
        %v1289 = vadd.f32 %v905, %v1288
        %v1290 = vpop.f32.mrf.mxu0
        %1291 = vdwg.mxu0
        %1292 = vmatpush.bf16.msra.mxu0 %v1161
        %1293 = vmatpush.bf16.msra.mxu0 %v1157
        %1294 = vmatpush.bf16.msra.mxu0 %v1153
        %1295 = vmatpush.bf16.msra.mxu0 %v1149
        %1296 = vmatpush.bf16.msra.mxu0 %v1145
        %1297 = vmatpush.bf16.msra.mxu0 %v1141
        %1298 = vmatpush.bf16.msra.mxu0 %v1137
        %1299 = vmatpush.bf16.msra.mxu0 %v1133
        %1300 = vmatmul.bf16.gmra.mxu0 %v826
        %v1301 = vpop.f32.mrf.mxu0
        %v1302 = vadd.f32 %v1289, %v1301
        %v1303 = vpop.f32.mrf.mxu0
        %1304 = vdwg.mxu0
        %1305 = vmatpush.bf16.msra.mxu0 %v1130
        %1306 = vmatpush.bf16.msra.mxu0 %v1126
        %1307 = vmatpush.bf16.msra.mxu0 %v1122
        %1308 = vmatpush.bf16.msra.mxu0 %v1118
        %1309 = vmatpush.bf16.msra.mxu0 %v1114
        %1310 = vmatpush.bf16.msra.mxu0 %v1110
        %1311 = vmatpush.bf16.msra.mxu0 %v1106
        %1312 = vmatpush.bf16.msra.mxu0 %v1102
        %1313 = vmatmul.bf16.gmra.mxu0 %v825
        %v1314 = vpop.f32.mrf.mxu0
        %v1315 = vadd.f32 %v906, %v1314
        %v1316 = vpop.f32.mrf.mxu0
        %1317 = vdwg.mxu0
        %1318 = vmatpush.bf16.msra.mxu0 %v1162
        %1319 = vmatpush.bf16.msra.mxu0 %v1158
        %1320 = vmatpush.bf16.msra.mxu0 %v1154
        %1321 = vmatpush.bf16.msra.mxu0 %v1150
        %1322 = vmatpush.bf16.msra.mxu0 %v1146
        %1323 = vmatpush.bf16.msra.mxu0 %v1142
        %1324 = vmatpush.bf16.msra.mxu0 %v1138
        %1325 = vmatpush.bf16.msra.mxu0 %v1134
        %1326 = vmatmul.bf16.gmra.mxu0 %v826
        %v1327 = vpop.f32.mrf.mxu0
        %v1328 = vadd.f32 %v1315, %v1327
        %v1329 = vpop.f32.mrf.mxu0
        %1330 = vdwg.mxu0
        %v1331 = vadd.f32 %v1250, %v1276
        %v1332 = vadd.f32 %v1331, %v1302
        %v1333 = vadd.f32 %v1332, %v1328
        %1334 = vadd.xlane.f32.xlu0 %v1333
        %v1335 = vpop.xlane.xlu0 %1334
        %v1336 = vmul.f32 %v1335, 0.001953125
        %v1337 = vmul.f32 %v1250, %v1250
        %v1338 = vmul.f32 %v1276, %v1276
        %v1339 = vmul.f32 %v1302, %v1302
        %v1340 = vmul.f32 %v1328, %v1328
        %v1341 = vadd.f32 %v1337, %v1338
        %v1342 = vadd.f32 %v1341, %v1339
        %v1343 = vadd.f32 %v1342, %v1340
        %1344 = vadd.xlane.f32.xlu0 %v1343
        %v1345 = vpop.xlane.xlu0 %1344
        %v1346 = vmul.f32 %v1345, 0.001953125
        %v1347 = vmul.f32 %v1336, %v1336
        %v1348 = vsub.f32 %v1346, %v1347
        %v1349 = vadd.f32 %v1348, 1e-05
        %v1350 = vrsqrt.pop %v1349
        %v1351 = vmul.f32 %v1350, %v1349
        %v1352 = vmul.f32 %v1351, %v1350
        %v1353 = vmul.f32 0.5, %v1352
        %v1354 = vsub.f32 1.5, %v1353
        %v1355 = vmul.f32 %v1350, %v1354
        %vm1356 = vweird.f32 %v1349
        %vm1357 = vweird.f32 %v1350
        %vm1358 = vmor %vm1356, %vm1357
        %v1359 = vsel %vm1358, %v1350, %v1355
        %v1360 = vsub.f32 %v1250, %v1336
        %v1361 = vsub.f32 %v1276, %v1336
        %v1362 = vsub.f32 %v1302, %v1336
        %v1363 = vsub.f32 %v1328, %v1336
        %v1364 = vmul.f32 %v1360, %v1359
        %v1365 = vmul.f32 %v1361, %v1359
        %v1366 = vmul.f32 %v1362, %v1359
        %v1367 = vmul.f32 %v1363, %v1359
        %v1368 = vperm.slane %v891, 1
        %v1369 = vperm.slane %v891, 5
        %v1370 = vperm.slane %v892, 1
        %v1371 = vperm.slane %v892, 5
        %v1376 = vperm.slane %v1368, 1
        %v1377 = vperm.slane %v1369, 1
        %v1378 = vperm.slane %v1370, 1
        %v1379 = vperm.slane %v1371, 1
        %v1380 = vmul.f32 %v1364, %v1376
        %v1381 = vmul.f32 %v1365, %v1377
        %v1382 = vmul.f32 %v1366, %v1378
        %v1383 = vmul.f32 %v1367, %v1379
        %v1384 = vperm.slane %v891, 2
        %v1385 = vperm.slane %v891, 6
        %v1386 = vperm.slane %v892, 2
        %v1387 = vperm.slane %v892, 6
        %v1392 = vperm.slane %v1384, 2
        %v1393 = vperm.slane %v1385, 2
        %v1394 = vperm.slane %v1386, 2
        %v1395 = vperm.slane %v1387, 2
        %v1396 = vadd.f32 %v1380, %v1392
        %v1397 = vadd.f32 %v1381, %v1393
        %v1398 = vadd.f32 %v1382, %v1394
        %v1399 = vadd.f32 %v1383, %v1395
        %v1400 = vmul.f32 %v1396, %v1396
        %v1401 = vmul.f32 %v1397, %v1397
        %v1402 = vmul.f32 %v1398, %v1398
        %v1403 = vmul.f32 %v1399, %v1399
        %v1404 = vmul.f32 %v1400, %v1396
        %v1405 = vmul.f32 %v1401, %v1397
        %v1406 = vmul.f32 %v1402, %v1398
        %v1407 = vmul.f32 %v1403, %v1399
        %v1408 = vmul.f32 %v1404, 0.044715
        %v1409 = vmul.f32 %v1405, 0.044715
        %v1410 = vmul.f32 %v1406, 0.044715
        %v1411 = vmul.f32 %v1407, 0.044715
        %v1412 = vadd.f32 %v1396, %v1408
        %v1413 = vadd.f32 %v1397, %v1409
        %v1414 = vadd.f32 %v1398, %v1410
        %v1415 = vadd.f32 %v1399, %v1411
        %v1416 = vmul.f32 %v1412, 0.7978846
        %v1417 = vmul.f32 %v1413, 0.7978846
        %v1418 = vmul.f32 %v1414, 0.7978846
        %v1419 = vmul.f32 %v1415, 0.7978846
        %v1420 = vmul.f32 %v1396, 0.5
        %v1421 = vmul.f32 %v1397, 0.5
        %v1422 = vmul.f32 %v1398, 0.5
        %v1423 = vmul.f32 %v1399, 0.5
        %v1424 = vtanh.pop %v1416
        %v1425 = vtanh.pop %v1417
        %v1426 = vtanh.pop %v1418
        %v1427 = vtanh.pop %v1419
        %v1428 = vadd.f32 %v1424, 1.0
        %v1429 = vadd.f32 %v1425, 1.0
        %v1430 = vadd.f32 %v1426, 1.0
        %v1431 = vadd.f32 %v1427, 1.0
        %v1432 = vmul.f32 %v1420, %v1428
        %v1433 = vmul.f32 %v1421, %v1429
        %v1434 = vmul.f32 %v1422, %v1430
        %v1435 = vmul.f32 %v1423, %v1431
        %v1436 = vpack.c.bf16 %v1432, %v1432
        %v1437 = vpack.c.bf16 %v1433, %v1433
        %v1438 = vpack.c.bf16 %v1434, %v1434
        %v1439 = vpack.c.bf16 %v1435, %v1435
        %v1440 = vld [vmem:[#allocation7] sm:$0xff]
        %v1441 = vld [vmem:[#allocation7 + $0x8] sm:$0xff]
        %v1442 = vld [vmem:[#allocation7 + $0x10] sm:$0xff]
        %v1443 = vld [vmem:[#allocation7 + $0x18] sm:$0xff]
        %v1444 = vld [vmem:[#allocation7 + $0x20] sm:$0xff]
        %v1445 = vld [vmem:[#allocation7 + $0x28] sm:$0xff]
        %v1446 = vld [vmem:[#allocation7 + $0x30] sm:$0xff]
        %v1447 = vld [vmem:[#allocation7 + $0x38] sm:$0xff]
        %v1448 = vld [vmem:[#allocation7 + $0x40] sm:$0xff]
        %v1449 = vld [vmem:[#allocation7 + $0x48] sm:$0xff]
        %v1450 = vld [vmem:[#allocation7 + $0x50] sm:$0xff]
        %v1451 = vld [vmem:[#allocation7 + $0x58] sm:$0xff]
        %v1452 = vld [vmem:[#allocation7 + $0x60] sm:$0xff]
        %v1453 = vld [vmem:[#allocation7 + $0x68] sm:$0xff]
        %v1454 = vld [vmem:[#allocation7 + $0x70] sm:$0xff]
        %v1455 = vld [vmem:[#allocation7 + $0x78] sm:$0xff]
        %v1456 = vld [vmem:[#allocation7 + $0x80] sm:$0xff]
        %v1457 = vld [vmem:[#allocation7 + $0x88] sm:$0xff]
        %v1458 = vld [vmem:[#allocation7 + $0x90] sm:$0xff]
        %v1459 = vld [vmem:[#allocation7 + $0x98] sm:$0xff]
        %v1460 = vld [vmem:[#allocation7 + $0xa0] sm:$0xff]
        %v1461 = vld [vmem:[#allocation7 + $0xa8] sm:$0xff]
        %v1462 = vld [vmem:[#allocation7 + $0xb0] sm:$0xff]
        %v1463 = vld [vmem:[#allocation7 + $0xb8] sm:$0xff]
        %v1464 = vld [vmem:[#allocation7 + $0xc0] sm:$0xff]
        %v1465 = vld [vmem:[#allocation7 + $0xc8] sm:$0xff]
        %v1466 = vld [vmem:[#allocation7 + $0xd0] sm:$0xff]
        %v1467 = vld [vmem:[#allocation7 + $0xd8] sm:$0xff]
        %v1468 = vld [vmem:[#allocation7 + $0xe0] sm:$0xff]
        %v1469 = vld [vmem:[#allocation7 + $0xe8] sm:$0xff]
        %v1470 = vld [vmem:[#allocation7 + $0xf0] sm:$0xff]
        %v1471 = vld [vmem:[#allocation7 + $0xf8] sm:$0xff]
        %v1472 = vld [vmem:[#allocation7 + $0x100] sm:$0xff]
        %v1473 = vld [vmem:[#allocation7 + $0x108] sm:$0xff]
        %v1474 = vld [vmem:[#allocation7 + $0x110] sm:$0xff]
        %v1475 = vld [vmem:[#allocation7 + $0x118] sm:$0xff]
        %v1476 = vld [vmem:[#allocation7 + $0x120] sm:$0xff]
        %v1477 = vld [vmem:[#allocation7 + $0x128] sm:$0xff]
        %v1478 = vld [vmem:[#allocation7 + $0x130] sm:$0xff]
        %v1479 = vld [vmem:[#allocation7 + $0x138] sm:$0xff]
        %v1480 = vld [vmem:[#allocation7 + $0x140] sm:$0xff]
        %v1481 = vld [vmem:[#allocation7 + $0x148] sm:$0xff]
        %v1482 = vld [vmem:[#allocation7 + $0x150] sm:$0xff]
        %v1483 = vld [vmem:[#allocation7 + $0x158] sm:$0xff]
        %v1484 = vld [vmem:[#allocation7 + $0x160] sm:$0xff]
        %v1485 = vld [vmem:[#allocation7 + $0x168] sm:$0xff]
        %v1486 = vld [vmem:[#allocation7 + $0x170] sm:$0xff]
        %v1487 = vld [vmem:[#allocation7 + $0x178] sm:$0xff]
        %v1488 = vld [vmem:[#allocation7 + $0x180] sm:$0xff]
        %v1489 = vld [vmem:[#allocation7 + $0x188] sm:$0xff]
        %v1490 = vld [vmem:[#allocation7 + $0x190] sm:$0xff]
        %v1491 = vld [vmem:[#allocation7 + $0x198] sm:$0xff]
        %v1492 = vld [vmem:[#allocation7 + $0x1a0] sm:$0xff]
        %v1493 = vld [vmem:[#allocation7 + $0x1a8] sm:$0xff]
        %v1494 = vld [vmem:[#allocation7 + $0x1b0] sm:$0xff]
        %v1495 = vld [vmem:[#allocation7 + $0x1b8] sm:$0xff]
        %v1496 = vld [vmem:[#allocation7 + $0x1c0] sm:$0xff]
        %v1497 = vld [vmem:[#allocation7 + $0x1c8] sm:$0xff]
        %v1498 = vld [vmem:[#allocation7 + $0x1d0] sm:$0xff]
        %v1499 = vld [vmem:[#allocation7 + $0x1d8] sm:$0xff]
        %v1500 = vld [vmem:[#allocation7 + $0x1e0] sm:$0xff]
        %v1501 = vld [vmem:[#allocation7 + $0x1e8] sm:$0xff]
        %v1502 = vld [vmem:[#allocation7 + $0x1f0] sm:$0xff]
        %v1503 = vld [vmem:[#allocation7 + $0x1f8] sm:$0xff]
        %v1504 = vld [vmem:[%s8] sm:$0x77]
        %v1506 = vperm.slane %v1504, 0
        %v1507 = vperm.slane %v1504, 4
        %v1510 = vperm.slane %v1506, 0
        %v1511 = vperm.slane %v1507, 0
        %v1576 = vunpack.c.l.b16 %v1440
        %v1577 = vunpack.c.h.b16 %v1440
        %v1578 = vunpack.c.l.b16 %v1441
        %v1579 = vunpack.c.h.b16 %v1441
        %v1580 = vunpack.c.l.b16 %v1442
        %v1581 = vunpack.c.h.b16 %v1442
        %v1582 = vunpack.c.l.b16 %v1443
        %v1583 = vunpack.c.h.b16 %v1443
        %v1584 = vunpack.c.l.b16 %v1444
        %v1585 = vunpack.c.h.b16 %v1444
        %v1586 = vunpack.c.l.b16 %v1445
        %v1587 = vunpack.c.h.b16 %v1445
        %v1588 = vunpack.c.l.b16 %v1446
        %v1589 = vunpack.c.h.b16 %v1446
        %v1590 = vunpack.c.l.b16 %v1447
        %v1591 = vunpack.c.h.b16 %v1447
        %v1592 = vunpack.c.l.b16 %v1448
        %v1593 = vunpack.c.h.b16 %v1448
        %v1594 = vunpack.c.l.b16 %v1449
        %v1595 = vunpack.c.h.b16 %v1449
        %v1596 = vunpack.c.l.b16 %v1450
        %v1597 = vunpack.c.h.b16 %v1450
        %v1598 = vunpack.c.l.b16 %v1451
        %v1599 = vunpack.c.h.b16 %v1451
        %v1600 = vunpack.c.l.b16 %v1452
        %v1601 = vunpack.c.h.b16 %v1452
        %v1602 = vunpack.c.l.b16 %v1453
        %v1603 = vunpack.c.h.b16 %v1453
        %v1604 = vunpack.c.l.b16 %v1454
        %v1605 = vunpack.c.h.b16 %v1454
        %v1606 = vunpack.c.l.b16 %v1455
        %v1607 = vunpack.c.h.b16 %v1455
        %v1608 = vunpack.c.l.b16 %v1456
        %v1609 = vunpack.c.h.b16 %v1456
        %v1610 = vunpack.c.l.b16 %v1457
        %v1611 = vunpack.c.h.b16 %v1457
        %v1612 = vunpack.c.l.b16 %v1458
        %v1613 = vunpack.c.h.b16 %v1458
        %v1614 = vunpack.c.l.b16 %v1459
        %v1615 = vunpack.c.h.b16 %v1459
        %v1616 = vunpack.c.l.b16 %v1460
        %v1617 = vunpack.c.h.b16 %v1460
        %v1618 = vunpack.c.l.b16 %v1461
        %v1619 = vunpack.c.h.b16 %v1461
        %v1620 = vunpack.c.l.b16 %v1462
        %v1621 = vunpack.c.h.b16 %v1462
        %v1622 = vunpack.c.l.b16 %v1463
        %v1623 = vunpack.c.h.b16 %v1463
        %v1624 = vunpack.c.l.b16 %v1464
        %v1625 = vunpack.c.h.b16 %v1464
        %v1626 = vunpack.c.l.b16 %v1465
        %v1627 = vunpack.c.h.b16 %v1465
        %v1628 = vunpack.c.l.b16 %v1466
        %v1629 = vunpack.c.h.b16 %v1466
        %v1630 = vunpack.c.l.b16 %v1467
        %v1631 = vunpack.c.h.b16 %v1467
        %v1632 = vunpack.c.l.b16 %v1468
        %v1633 = vunpack.c.h.b16 %v1468
        %v1634 = vunpack.c.l.b16 %v1469
        %v1635 = vunpack.c.h.b16 %v1469
        %v1636 = vunpack.c.l.b16 %v1470
        %v1637 = vunpack.c.h.b16 %v1470
        %v1638 = vunpack.c.l.b16 %v1471
        %v1639 = vunpack.c.h.b16 %v1471
        %v1640 = vunpack.c.l.b16 %v1472
        %v1641 = vunpack.c.h.b16 %v1472
        %v1642 = vunpack.c.l.b16 %v1473
        %v1643 = vunpack.c.h.b16 %v1473
        %v1644 = vunpack.c.l.b16 %v1474
        %v1645 = vunpack.c.h.b16 %v1474
        %v1646 = vunpack.c.l.b16 %v1475
        %v1647 = vunpack.c.h.b16 %v1475
        %v1648 = vunpack.c.l.b16 %v1476
        %v1649 = vunpack.c.h.b16 %v1476
        %v1650 = vunpack.c.l.b16 %v1477
        %v1651 = vunpack.c.h.b16 %v1477
        %v1652 = vunpack.c.l.b16 %v1478
        %v1653 = vunpack.c.h.b16 %v1478
        %v1654 = vunpack.c.l.b16 %v1479
        %v1655 = vunpack.c.h.b16 %v1479
        %v1656 = vunpack.c.l.b16 %v1480
        %v1657 = vunpack.c.h.b16 %v1480
        %v1658 = vunpack.c.l.b16 %v1481
        %v1659 = vunpack.c.h.b16 %v1481
        %v1660 = vunpack.c.l.b16 %v1482
        %v1661 = vunpack.c.h.b16 %v1482
        %v1662 = vunpack.c.l.b16 %v1483
        %v1663 = vunpack.c.h.b16 %v1483
        %v1664 = vunpack.c.l.b16 %v1484
        %v1665 = vunpack.c.h.b16 %v1484
        %v1666 = vunpack.c.l.b16 %v1485
        %v1667 = vunpack.c.h.b16 %v1485
        %v1668 = vunpack.c.l.b16 %v1486
        %v1669 = vunpack.c.h.b16 %v1486
        %v1670 = vunpack.c.l.b16 %v1487
        %v1671 = vunpack.c.h.b16 %v1487
        %v1672 = vunpack.c.l.b16 %v1488
        %v1673 = vunpack.c.h.b16 %v1488
        %v1674 = vunpack.c.l.b16 %v1489
        %v1675 = vunpack.c.h.b16 %v1489
        %v1676 = vunpack.c.l.b16 %v1490
        %v1677 = vunpack.c.h.b16 %v1490
        %v1678 = vunpack.c.l.b16 %v1491
        %v1679 = vunpack.c.h.b16 %v1491
        %v1680 = vunpack.c.l.b16 %v1492
        %v1681 = vunpack.c.h.b16 %v1492
        %v1682 = vunpack.c.l.b16 %v1493
        %v1683 = vunpack.c.h.b16 %v1493
        %v1684 = vunpack.c.l.b16 %v1494
        %v1685 = vunpack.c.h.b16 %v1494
        %v1686 = vunpack.c.l.b16 %v1495
        %v1687 = vunpack.c.h.b16 %v1495
        %v1688 = vunpack.c.l.b16 %v1496
        %v1689 = vunpack.c.h.b16 %v1496
        %v1690 = vunpack.c.l.b16 %v1497
        %v1691 = vunpack.c.h.b16 %v1497
        %v1692 = vunpack.c.l.b16 %v1498
        %v1693 = vunpack.c.h.b16 %v1498
        %v1694 = vunpack.c.l.b16 %v1499
        %v1695 = vunpack.c.h.b16 %v1499
        %v1696 = vunpack.c.l.b16 %v1500
        %v1697 = vunpack.c.h.b16 %v1500
        %v1698 = vunpack.c.l.b16 %v1501
        %v1699 = vunpack.c.h.b16 %v1501
        %v1700 = vunpack.c.l.b16 %v1502
        %v1701 = vunpack.c.h.b16 %v1502
        %v1702 = vunpack.c.l.b16 %v1503
        %v1703 = vunpack.c.h.b16 %v1503
        %v1704 = vpack.c.b16 %v1578, %v1576
        %v1705 = vpack.c.b16 %v1579, %v1577
        %v1706 = vpack.c.b16 %v1582, %v1580
        %v1707 = vpack.c.b16 %v1583, %v1581
        %v1708 = vpack.c.b16 %v1586, %v1584
        %v1709 = vpack.c.b16 %v1587, %v1585
        %v1710 = vpack.c.b16 %v1590, %v1588
        %v1711 = vpack.c.b16 %v1591, %v1589
        %v1712 = vpack.c.b16 %v1594, %v1592
        %v1713 = vpack.c.b16 %v1595, %v1593
        %v1714 = vpack.c.b16 %v1598, %v1596
        %v1715 = vpack.c.b16 %v1599, %v1597
        %v1716 = vpack.c.b16 %v1602, %v1600
        %v1717 = vpack.c.b16 %v1603, %v1601
        %v1718 = vpack.c.b16 %v1606, %v1604
        %v1719 = vpack.c.b16 %v1607, %v1605
        %v1720 = vpack.c.b16 %v1610, %v1608
        %v1721 = vpack.c.b16 %v1611, %v1609
        %v1722 = vpack.c.b16 %v1614, %v1612
        %v1723 = vpack.c.b16 %v1615, %v1613
        %v1724 = vpack.c.b16 %v1618, %v1616
        %v1725 = vpack.c.b16 %v1619, %v1617
        %v1726 = vpack.c.b16 %v1622, %v1620
        %v1727 = vpack.c.b16 %v1623, %v1621
        %v1728 = vpack.c.b16 %v1626, %v1624
        %v1729 = vpack.c.b16 %v1627, %v1625
        %v1730 = vpack.c.b16 %v1630, %v1628
        %v1731 = vpack.c.b16 %v1631, %v1629
        %v1732 = vpack.c.b16 %v1634, %v1632
        %v1733 = vpack.c.b16 %v1635, %v1633
        %v1734 = vpack.c.b16 %v1638, %v1636
        %v1735 = vpack.c.b16 %v1639, %v1637
        %v1736 = vpack.c.b16 %v1642, %v1640
        %v1737 = vpack.c.b16 %v1643, %v1641
        %v1738 = vpack.c.b16 %v1646, %v1644
        %v1739 = vpack.c.b16 %v1647, %v1645
        %v1740 = vpack.c.b16 %v1650, %v1648
        %v1741 = vpack.c.b16 %v1651, %v1649
        %v1742 = vpack.c.b16 %v1654, %v1652
        %v1743 = vpack.c.b16 %v1655, %v1653
        %v1744 = vpack.c.b16 %v1658, %v1656
        %v1745 = vpack.c.b16 %v1659, %v1657
        %v1746 = vpack.c.b16 %v1662, %v1660
        %v1747 = vpack.c.b16 %v1663, %v1661
        %v1748 = vpack.c.b16 %v1666, %v1664
        %v1749 = vpack.c.b16 %v1667, %v1665
        %v1750 = vpack.c.b16 %v1670, %v1668
        %v1751 = vpack.c.b16 %v1671, %v1669
        %v1752 = vpack.c.b16 %v1674, %v1672
        %v1753 = vpack.c.b16 %v1675, %v1673
        %v1754 = vpack.c.b16 %v1678, %v1676
        %v1755 = vpack.c.b16 %v1679, %v1677
        %v1756 = vpack.c.b16 %v1682, %v1680
        %v1757 = vpack.c.b16 %v1683, %v1681
        %v1758 = vpack.c.b16 %v1686, %v1684
        %v1759 = vpack.c.b16 %v1687, %v1685
        %v1760 = vpack.c.b16 %v1690, %v1688
        %v1761 = vpack.c.b16 %v1691, %v1689
        %v1762 = vpack.c.b16 %v1694, %v1692
        %v1763 = vpack.c.b16 %v1695, %v1693
        %v1764 = vpack.c.b16 %v1698, %v1696
        %v1765 = vpack.c.b16 %v1699, %v1697
        %v1766 = vpack.c.b16 %v1702, %v1700
        %v1767 = vpack.c.b16 %v1703, %v1701
        %1832 = vmatpush.bf16.msra.mxu0 %v1718
        %1833 = vmatpush.bf16.msra.mxu0 %v1716
        %1834 = vmatpush.bf16.msra.mxu0 %v1714
        %1835 = vmatpush.bf16.msra.mxu0 %v1712
        %1836 = vmatpush.bf16.msra.mxu0 %v1710
        %1837 = vmatpush.bf16.msra.mxu0 %v1708
        %1838 = vmatpush.bf16.msra.mxu0 %v1706
        %1839 = vmatpush.bf16.msra.mxu0 %v1704
        %1840 = vmatmul.bf16.gmra.mxu0 %v1436
        %v1841 = vpop.f32.mrf.mxu0
        %v1842 = vadd.f32 %v1510, %v1841
        %v1843 = vpop.f32.mrf.mxu0
        %1844 = vdwg.mxu0
        %1845 = vmatpush.bf16.msra.mxu0 %v1734
        %1846 = vmatpush.bf16.msra.mxu0 %v1732
        %1847 = vmatpush.bf16.msra.mxu0 %v1730
        %1848 = vmatpush.bf16.msra.mxu0 %v1728
        %1849 = vmatpush.bf16.msra.mxu0 %v1726
        %1850 = vmatpush.bf16.msra.mxu0 %v1724
        %1851 = vmatpush.bf16.msra.mxu0 %v1722
        %1852 = vmatpush.bf16.msra.mxu0 %v1720
        %1853 = vmatmul.bf16.gmra.mxu0 %v1437
        %v1854 = vpop.f32.mrf.mxu0
        %v1855 = vadd.f32 %v1842, %v1854
        %v1856 = vpop.f32.mrf.mxu0
        %1857 = vdwg.mxu0
        %1858 = vmatpush.bf16.msra.mxu0 %v1750
        %1859 = vmatpush.bf16.msra.mxu0 %v1748
        %1860 = vmatpush.bf16.msra.mxu0 %v1746
        %1861 = vmatpush.bf16.msra.mxu0 %v1744
        %1862 = vmatpush.bf16.msra.mxu0 %v1742
        %1863 = vmatpush.bf16.msra.mxu0 %v1740
        %1864 = vmatpush.bf16.msra.mxu0 %v1738
        %1865 = vmatpush.bf16.msra.mxu0 %v1736
        %1866 = vmatmul.bf16.gmra.mxu0 %v1438
        %v1867 = vpop.f32.mrf.mxu0
        %v1868 = vadd.f32 %v1855, %v1867
        %v1869 = vpop.f32.mrf.mxu0
        %1870 = vdwg.mxu0
        %1871 = vmatpush.bf16.msra.mxu0 %v1766
        %1872 = vmatpush.bf16.msra.mxu0 %v1764
        %1873 = vmatpush.bf16.msra.mxu0 %v1762
        %1874 = vmatpush.bf16.msra.mxu0 %v1760
        %1875 = vmatpush.bf16.msra.mxu0 %v1758
        %1876 = vmatpush.bf16.msra.mxu0 %v1756
        %1877 = vmatpush.bf16.msra.mxu0 %v1754
        %1878 = vmatpush.bf16.msra.mxu0 %v1752
        %1879 = vmatmul.bf16.gmra.mxu0 %v1439
        %v1880 = vpop.f32.mrf.mxu0
        %v1881 = vadd.f32 %v1868, %v1880
        %v1882 = vpop.f32.mrf.mxu0
        %1883 = vdwg.mxu0
        %1884 = vmatpush.bf16.msra.mxu0 %v1719
        %1885 = vmatpush.bf16.msra.mxu0 %v1717
        %1886 = vmatpush.bf16.msra.mxu0 %v1715
        %1887 = vmatpush.bf16.msra.mxu0 %v1713
        %1888 = vmatpush.bf16.msra.mxu0 %v1711
        %1889 = vmatpush.bf16.msra.mxu0 %v1709
        %1890 = vmatpush.bf16.msra.mxu0 %v1707
        %1891 = vmatpush.bf16.msra.mxu0 %v1705
        %1892 = vmatmul.bf16.gmra.mxu0 %v1436
        %v1893 = vpop.f32.mrf.mxu0
        %v1894 = vadd.f32 %v1511, %v1893
        %v1895 = vpop.f32.mrf.mxu0
        %1896 = vdwg.mxu0
        %1897 = vmatpush.bf16.msra.mxu0 %v1735
        %1898 = vmatpush.bf16.msra.mxu0 %v1733
        %1899 = vmatpush.bf16.msra.mxu0 %v1731
        %1900 = vmatpush.bf16.msra.mxu0 %v1729
        %1901 = vmatpush.bf16.msra.mxu0 %v1727
        %1902 = vmatpush.bf16.msra.mxu0 %v1725
        %1903 = vmatpush.bf16.msra.mxu0 %v1723
        %1904 = vmatpush.bf16.msra.mxu0 %v1721
        %1905 = vmatmul.bf16.gmra.mxu0 %v1437
        %v1906 = vpop.f32.mrf.mxu0
        %v1907 = vadd.f32 %v1894, %v1906
        %v1908 = vpop.f32.mrf.mxu0
        %1909 = vdwg.mxu0
        %1910 = vmatpush.bf16.msra.mxu0 %v1751
        %1911 = vmatpush.bf16.msra.mxu0 %v1749
        %1912 = vmatpush.bf16.msra.mxu0 %v1747
        %1913 = vmatpush.bf16.msra.mxu0 %v1745
        %1914 = vmatpush.bf16.msra.mxu0 %v1743
        %1915 = vmatpush.bf16.msra.mxu0 %v1741
        %1916 = vmatpush.bf16.msra.mxu0 %v1739
        %1917 = vmatpush.bf16.msra.mxu0 %v1737
        %1918 = vmatmul.bf16.gmra.mxu0 %v1438
        %v1919 = vpop.f32.mrf.mxu0
        %v1920 = vadd.f32 %v1907, %v1919
        %v1921 = vpop.f32.mrf.mxu0
        %1922 = vdwg.mxu0
        %1923 = vmatpush.bf16.msra.mxu0 %v1767
        %1924 = vmatpush.bf16.msra.mxu0 %v1765
        %1925 = vmatpush.bf16.msra.mxu0 %v1763
        %1926 = vmatpush.bf16.msra.mxu0 %v1761
        %1927 = vmatpush.bf16.msra.mxu0 %v1759
        %1928 = vmatpush.bf16.msra.mxu0 %v1757
        %1929 = vmatpush.bf16.msra.mxu0 %v1755
        %1930 = vmatpush.bf16.msra.mxu0 %v1753
        %1931 = vmatmul.bf16.gmra.mxu0 %v1439
        %v1932 = vpop.f32.mrf.mxu0
        %v1933 = vadd.f32 %v1920, %v1932
        %v1934 = vpop.f32.mrf.mxu0
        %1935 = vdwg.mxu0
        %v1936 = vadd.f32 %v1881, %v1933
        %1937 = vadd.xlane.f32.xlu0 %v1936
        %v1938 = vpop.xlane.xlu0 %1937
        %v1939 = vmul.f32 %v1938, 0.00390625
        %v1940 = vmul.f32 %v1881, %v1881
        %v1941 = vmul.f32 %v1933, %v1933
        %v1942 = vadd.f32 %v1940, %v1941
        %1943 = vadd.xlane.f32.xlu0 %v1942
        %v1944 = vpop.xlane.xlu0 %1943
        %v1945 = vmul.f32 %v1944, 0.00390625
        %v1946 = vmul.f32 %v1939, %v1939
        %v1947 = vsub.f32 %v1945, %v1946
        %v1948 = vadd.f32 %v1947, 1e-05
        %v1949 = vrsqrt.pop %v1948
        %v1950 = vmul.f32 %v1949, %v1948
        %v1951 = vmul.f32 %v1950, %v1949
        %v1952 = vmul.f32 0.5, %v1951
        %v1953 = vsub.f32 1.5, %v1952
        %v1954 = vmul.f32 %v1949, %v1953
        %vm1955 = vweird.f32 %v1948
        %vm1956 = vweird.f32 %v1949
        %vm1957 = vmor %vm1955, %vm1956
        %v1958 = vsel %vm1957, %v1949, %v1954
        %v1959 = vsub.f32 %v1881, %v1939
        %v1960 = vsub.f32 %v1933, %v1939
        %v1961 = vmul.f32 %v1959, %v1958
        %v1962 = vmul.f32 %v1960, %v1958
        %v1963 = vperm.slane %v1504, 1
        %v1964 = vperm.slane %v1504, 5
        %v1967 = vperm.slane %v1963, 1
        %v1968 = vperm.slane %v1964, 1
        %v1969 = vmul.f32 %v1961, %v1967
        %v1970 = vmul.f32 %v1962, %v1968
        %v1971 = vperm.slane %v1504, 2
        %v1972 = vperm.slane %v1504, 6
        %v1975 = vperm.slane %v1971, 2
        %v1976 = vperm.slane %v1972, 2
        %v1977 = vadd.f32 %v1969, %v1975
        %v1978 = vadd.f32 %v1970, %v1976
        %v1979 = vmul.f32 %v1977, %v1977
        %v1980 = vmul.f32 %v1978, %v1978
        %v1981 = vmul.f32 %v1979, %v1977
        %v1982 = vmul.f32 %v1980, %v1978
        %v1983 = vmul.f32 %v1981, 0.044715
        %v1984 = vmul.f32 %v1982, 0.044715
        %v1985 = vadd.f32 %v1977, %v1983
        %v1986 = vadd.f32 %v1978, %v1984
        %v1987 = vmul.f32 %v1985, 0.7978846
        %v1988 = vmul.f32 %v1986, 0.7978846
        %v1989 = vmul.f32 %v1977, 0.5
        %v1990 = vmul.f32 %v1978, 0.5
        %v1991 = vtanh.pop %v1987
        %v1992 = vtanh.pop %v1988
        %v1993 = vadd.f32 %v1991, 1.0
        %v1994 = vadd.f32 %v1992, 1.0
        %v1995 = vmul.f32 %v1989, %v1993
        %v1996 = vmul.f32 %v1990, %v1994
        %v1997 = vpack.c.bf16 %v1995, %v1995
        %v1998 = vpack.c.bf16 %v1996, %v1996
        %v1999 = vld [vmem:[#allocation8] sm:$0xf]
        %v2000 = vld [vmem:[#allocation8 + $0x4] sm:$0xf]
        %v2001 = vld [vmem:[#allocation8 + $0x8] sm:$0xf]
        %v2002 = vld [vmem:[#allocation8 + $0xc] sm:$0xf]
        %v2003 = vld [vmem:[#allocation8 + $0x10] sm:$0xf]
        %v2004 = vld [vmem:[#allocation8 + $0x14] sm:$0xf]
        %v2005 = vld [vmem:[#allocation8 + $0x18] sm:$0xf]
        %v2006 = vld [vmem:[#allocation8 + $0x1c] sm:$0xf]
        %v2007 = vld [vmem:[#allocation8 + $0x20] sm:$0xf]
        %v2008 = vld [vmem:[#allocation8 + $0x24] sm:$0xf]
        %v2009 = vld [vmem:[#allocation8 + $0x28] sm:$0xf]
        %v2010 = vld [vmem:[#allocation8 + $0x2c] sm:$0xf]
        %v2011 = vld [vmem:[#allocation8 + $0x30] sm:$0xf]
        %v2012 = vld [vmem:[#allocation8 + $0x34] sm:$0xf]
        %v2013 = vld [vmem:[#allocation8 + $0x38] sm:$0xf]
        %v2014 = vld [vmem:[#allocation8 + $0x3c] sm:$0xf]
        %v2015 = vld [vmem:[#allocation8 + $0x40] sm:$0xf]
        %v2016 = vld [vmem:[#allocation8 + $0x44] sm:$0xf]
        %v2017 = vld [vmem:[#allocation8 + $0x48] sm:$0xf]
        %v2018 = vld [vmem:[#allocation8 + $0x4c] sm:$0xf]
        %v2019 = vld [vmem:[#allocation8 + $0x50] sm:$0xf]
        %v2020 = vld [vmem:[#allocation8 + $0x54] sm:$0xf]
        %v2021 = vld [vmem:[#allocation8 + $0x58] sm:$0xf]
        %v2022 = vld [vmem:[#allocation8 + $0x5c] sm:$0xf]
        %v2023 = vld [vmem:[#allocation8 + $0x60] sm:$0xf]
        %v2024 = vld [vmem:[#allocation8 + $0x64] sm:$0xf]
        %v2025 = vld [vmem:[#allocation8 + $0x68] sm:$0xf]
        %v2026 = vld [vmem:[#allocation8 + $0x6c] sm:$0xf]
        %v2027 = vld [vmem:[#allocation8 + $0x70] sm:$0xf]
        %v2028 = vld [vmem:[#allocation8 + $0x74] sm:$0xf]
        %v2029 = vld [vmem:[#allocation8 + $0x78] sm:$0xf]
        %v2030 = vld [vmem:[#allocation8 + $0x7c] sm:$0xf]
        %v2031 = vld [vmem:[%s10] sm:$0x7]
        %v2032 = vperm.slane %v2031, 0
        %v2065 = vunpack.c.l.b16 %v1999
        %v2066 = vunpack.c.l.b16 %v2000
        %v2067 = vunpack.c.l.b16 %v2001
        %v2068 = vunpack.c.l.b16 %v2002
        %v2069 = vunpack.c.l.b16 %v2003
        %v2070 = vunpack.c.l.b16 %v2004
        %v2071 = vunpack.c.l.b16 %v2005
        %v2072 = vunpack.c.l.b16 %v2006
        %v2073 = vunpack.c.l.b16 %v2007
        %v2074 = vunpack.c.l.b16 %v2008
        %v2075 = vunpack.c.l.b16 %v2009
        %v2076 = vunpack.c.l.b16 %v2010
        %v2077 = vunpack.c.l.b16 %v2011
        %v2078 = vunpack.c.l.b16 %v2012
        %v2079 = vunpack.c.l.b16 %v2013
        %v2080 = vunpack.c.l.b16 %v2014
        %v2081 = vunpack.c.l.b16 %v2015
        %v2082 = vunpack.c.l.b16 %v2016
        %v2083 = vunpack.c.l.b16 %v2017
        %v2084 = vunpack.c.l.b16 %v2018
        %v2085 = vunpack.c.l.b16 %v2019
        %v2086 = vunpack.c.l.b16 %v2020
        %v2087 = vunpack.c.l.b16 %v2021
        %v2088 = vunpack.c.l.b16 %v2022
        %v2089 = vunpack.c.l.b16 %v2023
        %v2090 = vunpack.c.l.b16 %v2024
        %v2091 = vunpack.c.l.b16 %v2025
        %v2092 = vunpack.c.l.b16 %v2026
        %v2093 = vunpack.c.l.b16 %v2027
        %v2094 = vunpack.c.l.b16 %v2028
        %v2095 = vunpack.c.l.b16 %v2029
        %v2096 = vunpack.c.l.b16 %v2030
        %v2097 = vpack.c.b16 %v2066, %v2065
        %v2098 = vpack.c.b16 %v2068, %v2067
        %v2099 = vpack.c.b16 %v2070, %v2069
        %v2100 = vpack.c.b16 %v2072, %v2071
        %v2101 = vpack.c.b16 %v2074, %v2073
        %v2102 = vpack.c.b16 %v2076, %v2075
        %v2103 = vpack.c.b16 %v2078, %v2077
        %v2104 = vpack.c.b16 %v2080, %v2079
        %v2105 = vpack.c.b16 %v2082, %v2081
        %v2106 = vpack.c.b16 %v2084, %v2083
        %v2107 = vpack.c.b16 %v2086, %v2085
        %v2108 = vpack.c.b16 %v2088, %v2087
        %v2109 = vpack.c.b16 %v2090, %v2089
        %v2110 = vpack.c.b16 %v2092, %v2091
        %v2111 = vpack.c.b16 %v2094, %v2093
        %v2112 = vpack.c.b16 %v2096, %v2095
        %2129 = vmatpush.bf16.msra.mxu0 %v2104
        %2130 = vmatpush.bf16.msra.mxu0 %v2103
        %2131 = vmatpush.bf16.msra.mxu0 %v2102
        %2132 = vmatpush.bf16.msra.mxu0 %v2101
        %2133 = vmatpush.bf16.msra.mxu0 %v2100
        %2134 = vmatpush.bf16.msra.mxu0 %v2099
        %2135 = vmatpush.bf16.msra.mxu0 %v2098
        %2136 = vmatpush.bf16.msra.mxu0 %v2097
        %2137 = vmatmul.bf16.gmra.mxu0 %v1997
        %v2138 = vpop.f32.mrf.mxu0
        %v2139 = vadd.f32 %v2032, %v2138
        %v2140 = vpop.f32.mrf.mxu0
        %2141 = vdwg.mxu0
        %2142 = vmatpush.bf16.msra.mxu0 %v2112
        %2143 = vmatpush.bf16.msra.mxu0 %v2111
        %2144 = vmatpush.bf16.msra.mxu0 %v2110
        %2145 = vmatpush.bf16.msra.mxu0 %v2109
        %2146 = vmatpush.bf16.msra.mxu0 %v2108
        %2147 = vmatpush.bf16.msra.mxu0 %v2107
        %2148 = vmatpush.bf16.msra.mxu0 %v2106
        %2149 = vmatpush.bf16.msra.mxu0 %v2105
        %2150 = vmatmul.bf16.gmra.mxu0 %v1998
        %v2151 = vpop.f32.mrf.mxu0
        %v2152 = vadd.f32 %v2139, %v2151
        %v2153 = vpop.f32.mrf.mxu0
        %2154 = vdwg.mxu0
        %2155 = vadd.xlane.f32.xlu0 %v2152
        %v2156 = vpop.xlane.xlu0 %2155
        %v2157 = vmul.f32 %v2156, 0.0078125
        %v2158 = vmul.f32 %v2152, %v2152
        %2159 = vadd.xlane.f32.xlu0 %v2158
        %v2160 = vpop.xlane.xlu0 %2159
        %v2161 = vmul.f32 %v2160, 0.0078125
        %v2162 = vmul.f32 %v2157, %v2157
        %v2163 = vsub.f32 %v2161, %v2162
        %v2164 = vadd.f32 %v2163, 1e-05
        %v2165 = vrsqrt.pop %v2164
        %v2166 = vmul.f32 %v2165, %v2164
        %v2167 = vmul.f32 %v2166, %v2165
        %v2168 = vmul.f32 0.5, %v2167
        %v2169 = vsub.f32 1.5, %v2168
        %v2170 = vmul.f32 %v2165, %v2169
        %vm2171 = vweird.f32 %v2164
        %vm2172 = vweird.f32 %v2165
        %vm2173 = vmor %vm2171, %vm2172
        %v2174 = vsel %vm2173, %v2165, %v2170
        %v2175 = vsub.f32 %v2152, %v2157
        %v2176 = vmul.f32 %v2175, %v2174
        %v2177 = vperm.slane %v2031, 1
        %v2178 = vmul.f32 %v2176, %v2177
        %v2179 = vperm.slane %v2031, 2
        %v2180 = vadd.f32 %v2178, %v2179
        %v2181 = vmul.f32 %v2180, %v2180
        %v2182 = vmul.f32 %v2181, %v2180
        %v2183 = vmul.f32 %v2182, 0.044715
        %v2184 = vadd.f32 %v2180, %v2183
        %v2185 = vmul.f32 %v2184, 0.7978846
        %v2186 = vmul.f32 %v2180, 0.5
        %v2187 = vtanh.pop %v2185
        %v2188 = vadd.f32 %v2187, 1.0
        %v2189 = vmul.f32 %v2186, %v2188
        %v2190 = vpack.c.bf16 %v2189, %v2189
        %v2191 = vld [vmem:[%s11] sm:$0xf]
        %v2192 = vld [vmem:[%s11 + $0x4] sm:$0xf]
        %v2193 = vld [vmem:[%s11 + $0x8] sm:$0xf]
        %v2194 = vld [vmem:[%s11 + $0xc] sm:$0xf]
        %v2195 = vld [vmem:[%s11 + $0x10] sm:$0xf]
        %v2196 = vld [vmem:[%s11 + $0x14] sm:$0xf]
        %v2197 = vld [vmem:[%s11 + $0x18] sm:$0xf]
        %v2198 = vld [vmem:[%s11 + $0x1c] sm:$0xf]
        %v2199 = vld [vmem:[%s11 + $0x20] sm:$0xf]
        %v2200 = vld [vmem:[%s11 + $0x24] sm:$0xf]
        %v2201 = vld [vmem:[%s11 + $0x28] sm:$0xf]
        %v2202 = vld [vmem:[%s11 + $0x2c] sm:$0xf]
        %v2203 = vld [vmem:[%s11 + $0x30] sm:$0xf]
        %v2204 = vld [vmem:[%s11 + $0x34] sm:$0xf]
        %v2205 = vld [vmem:[%s11 + $0x38] sm:$0xf]
        %v2206 = vld [vmem:[%s11 + $0x3c] sm:$0xf]
        %v2207 = vld [vmem:[%s12] sm:$0x7]
        %v2208 = vperm.slane %v2207, 0
        %v2225 = vunpack.c.l.b16 %v2191
        %v2226 = vunpack.c.l.b16 %v2192
        %v2227 = vunpack.c.l.b16 %v2193
        %v2228 = vunpack.c.l.b16 %v2194
        %v2229 = vunpack.c.l.b16 %v2195
        %v2230 = vunpack.c.l.b16 %v2196
        %v2231 = vunpack.c.l.b16 %v2197
        %v2232 = vunpack.c.l.b16 %v2198
        %v2233 = vunpack.c.l.b16 %v2199
        %v2234 = vunpack.c.l.b16 %v2200
        %v2235 = vunpack.c.l.b16 %v2201
        %v2236 = vunpack.c.l.b16 %v2202
        %v2237 = vunpack.c.l.b16 %v2203
        %v2238 = vunpack.c.l.b16 %v2204
        %v2239 = vunpack.c.l.b16 %v2205
        %v2240 = vunpack.c.l.b16 %v2206
        %v2241 = vpack.c.b16 %v2226, %v2225
        %v2242 = vpack.c.b16 %v2228, %v2227
        %v2243 = vpack.c.b16 %v2230, %v2229
        %v2244 = vpack.c.b16 %v2232, %v2231
        %v2245 = vpack.c.b16 %v2234, %v2233
        %v2246 = vpack.c.b16 %v2236, %v2235
        %v2247 = vpack.c.b16 %v2238, %v2237
        %v2248 = vpack.c.b16 %v2240, %v2239
        %2257 = vmatpush.bf16.msra.mxu0 %v2248
        %2258 = vmatpush.bf16.msra.mxu0 %v2247
        %2259 = vmatpush.bf16.msra.mxu0 %v2246
        %2260 = vmatpush.bf16.msra.mxu0 %v2245
        %2261 = vmatpush.bf16.msra.mxu0 %v2244
        %2262 = vmatpush.bf16.msra.mxu0 %v2243
        %2263 = vmatpush.bf16.msra.mxu0 %v2242
        %2264 = vmatpush.bf16.msra.mxu0 %v2241
        %2265 = vmatmul.bf16.gmra.mxu0 %v2190
        %v2266 = vpop.f32.mrf.mxu0
        %v2267 = vadd.f32 %v2208, %v2266
        %v2268 = vpop.f32.mrf.mxu0
        %2269 = vdwg.mxu0
        %vm2270 = vcmask 523264
        %v2271 = vsel %vm2270, %v2267, 0.0
        %2272 = vadd.xlane.f32.xlu0 %v2271
        %v2273 = vpop.xlane.xlu0 %2272
        %v2274 = vmul.f32 %v2273, 0.015625
        %v2275 = vmul.f32 %v2267, %v2267
        %v2276 = vsel %vm2270, %v2275, 0.0
        %2277 = vadd.xlane.f32.xlu0 %v2276
        %v2278 = vpop.xlane.xlu0 %2277
        %v2279 = vmul.f32 %v2278, 0.015625
        %v2280 = vmul.f32 %v2274, %v2274
        %v2281 = vsub.f32 %v2279, %v2280
        %v2282 = vadd.f32 %v2281, 1e-05
        %v2283 = vrsqrt.pop %v2282
        %v2284 = vmul.f32 %v2283, %v2282
        %v2285 = vmul.f32 %v2284, %v2283
        %v2286 = vmul.f32 0.5, %v2285
        %v2287 = vsub.f32 1.5, %v2286
        %v2288 = vmul.f32 %v2283, %v2287
        %vm2289 = vweird.f32 %v2282
        %vm2290 = vweird.f32 %v2283
        %vm2291 = vmor %vm2289, %vm2290
        %v2292 = vsel %vm2291, %v2283, %v2288
        %v2293 = vsub.f32 %v2267, %v2274
        %v2294 = vmul.f32 %v2293, %v2292
        %v2295 = vperm.slane %v2207, 1
        %v2296 = vmul.f32 %v2294, %v2295
        %v2297 = vperm.slane %v2207, 2
        %v2298 = vadd.f32 %v2296, %v2297
        %v2299 = vmul.f32 %v2298, %v2298
        %v2300 = vmul.f32 %v2299, %v2298
        %v2301 = vmul.f32 %v2300, 0.044715
        %v2302 = vadd.f32 %v2298, %v2301
        %v2303 = vmul.f32 %v2302, 0.7978846
        %v2304 = vmul.f32 %v2298, 0.5
        %v2305 = vtanh.pop %v2303
        %v2306 = vadd.f32 %v2305, 1.0
        %v2307 = vmul.f32 %v2304, %v2306
        %v2308 = vpack.c.bf16 %v2307, %v2307
        %v2309 = vld [vmem:[%s13] sm:$0xf]
        %v2310 = vld [vmem:[%s13 + $0x4] sm:$0xf]
        %v2311 = vld [vmem:[%s13 + $0x8] sm:$0xf]
        %v2312 = vld [vmem:[%s13 + $0xc] sm:$0xf]
        %v2313 = vld [vmem:[%s13 + $0x10] sm:$0xf]
        %v2314 = vld [vmem:[%s13 + $0x14] sm:$0xf]
        %v2315 = vld [vmem:[%s13 + $0x18] sm:$0xf]
        %v2316 = vld [vmem:[%s13 + $0x1c] sm:$0xf]
        %v2317 = vld [vmem:[%s14] sm:$0x1]
        %v2319 = vperm.slane %v2317, 0
        %v2329 = vunpack.c.l.b16 %v2309
        %v2330 = vunpack.c.l.b16 %v2310
        %v2331 = vunpack.c.l.b16 %v2311
        %v2332 = vunpack.c.l.b16 %v2312
        %v2333 = vunpack.c.l.b16 %v2313
        %v2334 = vunpack.c.l.b16 %v2314
        %v2335 = vunpack.c.l.b16 %v2315
        %v2336 = vunpack.c.l.b16 %v2316
        %v2337 = vpack.c.b16 %v2330, %v2329
        %v2338 = vpack.c.b16 %v2332, %v2331
        %v2339 = vpack.c.b16 %v2334, %v2333
        %v2340 = vpack.c.b16 %v2336, %v2335
        %v2346 = vsel %vm2270, %v2308, 0
        %2348 = vmatpush.bf16.msra.mxu0 0
        %2349 = vmatpush.bf16.msra.mxu0 0
        %2350 = vmatpush.bf16.msra.mxu0 0
        %2351 = vmatpush.bf16.msra.mxu0 0
        %2352 = vmatpush.bf16.msra.mxu0 %v2340
        %2353 = vmatpush.bf16.msra.mxu0 %v2339
        %2354 = vmatpush.bf16.msra.mxu0 %v2338
        %2355 = vmatpush.bf16.msra.mxu0 %v2337
        %2356 = vmatmul.bf16.gmra.mxu0 %v2346
        %v2357 = vpop.f32.mrf.mxu0
        %v2358 = vadd.f32 %v2319, %v2357
        %v2359 = vpop.f32.mrf.mxu0
        %2360 = vdwg.mxu0
        %v2361 = vtanh.pop %v2358
        %v2362 = vadd.f32 %v2361, 1.0
        %v2363 = vmul.f32 %v2362, 0.5
        %2364 = vst [vmem:[%s552] sm:$0xff] %v2363
        %s2365 = sand.u32 %s360, 1
        %s2366 = scalar_lea.sflag [#allocation4], %s2365
        %s2367 = sand.u32 %s360, 1
        %s2368 = smul.addr %s2367, 8
        %s2369 = scalar_lea.vmem [#allocation10], %s2368
        // Predicated region
        $region97: #{tpu_custom_call.1} parent=79 // pred_check
          %p2370 = pneg %p370
        $region98: #{tpu_custom_call.1} parent=79 // pred_check_branch
          %2372 = sbr.rel (%p2370) target = $region100
        $region99: #{tpu_custom_call.1} parent=79 // pred_region
          %2374 = vsyncadd %s2366, 0
          %s2375 = smul.addr %s32, 8
          %s2376 = scalar_lea.hbm %s15, %s2375
          %s2378 = sshll.u32 %s2369, 4
          %s2379 = int_to_ptr.vmem [resolvable:$true] %s2378
          %s2380 = sshll.u32 %s2376, 4
          %s2381 = int_to_ptr.hbm [resolvable:$true] %s2380
          %2383 = dma.vmem_to_hbm [thread:$0]  %s2379, 128, %s2381, %s2366
        $region100: #{tpu_custom_call.1} parent=79 // pred_fallthru
          _
      $region80: #{tpu_custom_call.1} parent=5 // pred_fallthru
        _
      %p2384 = scmp.le.s32.totalorder 2, %s27
      // Predicated region
      $region101: #{tpu_custom_call.1} parent=5 // pred_check
        %p2385 = pneg %p2384
      $region102: #{tpu_custom_call.1} parent=5 // pred_check_branch
        %2387 = sbr.rel (%p2385) target = $region104
      $region103: #{tpu_custom_call.1} parent=5 // pred_region
        %s2388 = ssub.s32 %s27, 2
        // Predicated region
        $region105: #{tpu_custom_call.1} parent=103 // pred_check
          %p2389 = pneg %p376
        $region106: #{tpu_custom_call.1} parent=103 // pred_check_branch
          %2391 = sbr.rel (%p2389) target = $region108
        $region107: #{tpu_custom_call.1} parent=103 // pred_region
          %s2392 = sand.u32 %s361, 1
          %s2393 = scalar_lea.sflag [#allocation4], %s2392
          %s2394 = sand.u32 %s361, 1
          %s2395 = smul.addr %s2394, 8
          %s2396 = scalar_lea.vmem [#allocation10], %s2395
          %2398 = dma.done %s2393, 128
        $region108: #{tpu_custom_call.1} parent=103 // pred_fallthru
          _
      $region104: #{tpu_custom_call.1} parent=5 // pred_fallthru
        _
    $region6: #{tpu_custom_call.1} parent=1 // loop_footer
      %s31 = sadd.s32 1, %s27
    $region7: #{tpu_custom_call.1} parent=1 // loop_footer_branch
      %26 = sbr.rel target = $region3
    $region8: #{tpu_custom_call.1} parent=1 // loop_exit
      _
    %2399 = vsyncpa [#allocation3], 1
    %s2400 = scalar_lea.sflag [#allocation3], 1
    %2401 = vsyncpa %s2400, 1
    %2402 = vsyncpa [#allocation6], 1
    %2403 = vsyncpa [#allocation9], 1
    %2404 = vsyncpa [#allocation4], 1
    %s2405 = scalar_lea.sflag [#allocation4], 1
    %2406 = vsyncpa %s2405, 1

</llo_original>
